<compile_context>
chip_gen: v7x
topology: tpu7x:2x2x1
jax: 0.10.0
libtpu: 0.0.40
codegen_flags: <defaults>
</compile_context>

<pallas_src>
import jax
import jax.numpy as jnp
from jax.experimental import pallas as pl
from jax.experimental.pallas import tpu as pltpu

INPUT_SIZE = 2019
H1, H2, H3, OUT = 256, 128, 64, 2


def _mlp_kernel(x_ref, w1_ref, b1_ref, w2_ref, b2_ref, w3_ref, b3_ref,
                w4_ref, b4_ref, o_ref):
    # fc1 + ReLU   (dropout1: identity at inference)
    x = x_ref[...].astype(jnp.bfloat16)
    h = jnp.dot(x, w1_ref[...], preferred_element_type=jnp.float32)
    h = jnp.maximum(h + b1_ref[...], 0.0)
    # fc2 + ReLU   (dropout2: identity at inference)
    h = jnp.dot(h.astype(jnp.bfloat16), w2_ref[...],
                preferred_element_type=jnp.float32)
    h = jnp.maximum(h + b2_ref[...], 0.0)
    # fc3 + ReLU
    h = jnp.dot(h.astype(jnp.bfloat16), w3_ref[...],
                preferred_element_type=jnp.float32)
    h = jnp.maximum(h + b3_ref[...], 0.0)
    # fc4 (no activation)
    h = jnp.dot(h.astype(jnp.bfloat16), w4_ref[...],
                preferred_element_type=jnp.float32)
    o_ref[...] = (h + b4_ref[...]).astype(o_ref.dtype)


def _round_up(n, m):
    return ((n + m - 1) // m) * m


@jax.jit
def ann_forward(x, params):
    """x: [B, INPUT_SIZE] f32 -> [B, 2] f32."""
    w1, b1, w2, b2, w3, b3, w4, b4 = params
    B, K = x.shape

    # Batch tile: 256 rows/step for large batches (fills MXU rows on v6e/v7x,
    # caps VMEM), round small batches up to a sublane multiple.
    TB = min(256, _round_up(B, 8))
    grid = (pl.cdiv(B, TB),)

    x_spec = pl.BlockSpec((TB, K), lambda i: (i, 0))
    # Constant block index -> weights/biases DMA'd once and stay VMEM-resident.
    const = lambda shape: pl.BlockSpec(shape, lambda i: (0, 0))
    out_spec = pl.BlockSpec((TB, OUT), lambda i: (i, 0))

    flops = 2 * B * (K * H1 + H1 * H2 + H2 * H3 + H3 * OUT)
    bytes_accessed = (
        x.size * x.dtype.itemsize
        + sum(int(p.size) * p.dtype.itemsize for p in params)
        + B * OUT * 4
    )

    return pl.pallas_call(
        _mlp_kernel,
        out_shape=jax.ShapeDtypeStruct((B, OUT), jnp.float32),
        grid=grid,
        in_specs=[
            x_spec,
            const((K, H1)), const((1, H1)),
            const((H1, H2)), const((1, H2)),
            const((H2, H3)), const((1, H3)),
            const((H3, OUT)), const((1, OUT)),
        ],
        out_specs=out_spec,
        compiler_params=pltpu.CompilerParams(
            dimension_semantics=("parallel",),
            vmem_limit_bytes=24 << 20,
        ),
        cost_estimate=pl.CostEstimate(
            flops=flops, transcendentals=0, bytes_accessed=bytes_accessed),
    )(x, w1, b1, w2, b2, w3, b3, w4, b4)


def init_params(key):
    """Deterministic params mimicking torch.nn.Linear default init
    (uniform +/- 1/sqrt(fan_in)); weights stored bf16 as [in, out],
    biases f32 as [1, out]."""
    dims = [(INPUT_SIZE, H1), (H1, H2), (H2, H3), (H3, OUT)]
    params = []
    for fan_in, fan_out in dims:
        key, kw, kb = jax.random.split(key, 3)
        bound = 1.0 / (fan_in ** 0.5)
        w = jax.random.uniform(kw, (fan_in, fan_out), jnp.float32, -bound, bound)
        b = jax.random.uniform(kb, (1, fan_out), jnp.float32, -bound, bound)
        params += [w.astype(jnp.bfloat16), b]
    return tuple(params)


def reference_forward(x, params):
    """Pure-JAX reference with identical bf16-input / f32-accumulate math."""
    w1, b1, w2, b2, w3, b3, w4, b4 = params

    def layer(h, w, b):
        return jnp.dot(h.astype(jnp.bfloat16), w,
                       preferred_element_type=jnp.float32) + b

    h = jnp.maximum(layer(x, w1, b1), 0.0)
    h = jnp.maximum(layer(h, w2, b2), 0.0)
    h = jnp.maximum(layer(h, w3, b3), 0.0)
    return layer(h, w4, b4)


if __name__ == "__main__":
    key = jax.random.PRNGKey(0)
    kx, kp = jax.random.split(key)
    batch = 8
    x = jax.random.normal(kx, (batch, INPUT_SIZE), jnp.float32)
    params = init_params(kp)

    out = jax.block_until_ready(ann_forward(x, params))
    ref = reference_forward(x, params)

    assert out.shape == (batch, OUT), out.shape
    assert jnp.allclose(out, ref, atol=1e-2, rtol=1e-2), "mismatch vs reference"

    print("KERNEL_OK")
</pallas_src>

<mosaic_0001>
module attributes {stable_mosaic.version = 11 : i64} {
  func.func @_mlp_kernel(%arg0: i32, %arg1: memref<8x2019xf32, #tpu.memory_space<vmem>>, %arg2: memref<2019x256xbf16, #tpu.memory_space<vmem>>, %arg3: memref<1x256xf32, #tpu.memory_space<vmem>>, %arg4: memref<256x128xbf16, #tpu.memory_space<vmem>>, %arg5: memref<1x128xf32, #tpu.memory_space<vmem>>, %arg6: memref<128x64xbf16, #tpu.memory_space<vmem>>, %arg7: memref<1x64xf32, #tpu.memory_space<vmem>>, %arg8: memref<64x2xbf16, #tpu.memory_space<vmem>>, %arg9: memref<1x2xf32, #tpu.memory_space<vmem>>, %arg10: memref<8x2xf32, #tpu.memory_space<vmem>>) attributes {dimension_semantics = [#tpu.dimension_semantics<parallel>], iteration_bounds = array<i64: 1>, scalar_prefetch = 0 : i64, scratch_operands = 0 : i64, tpu.core_type = #tpu.core_type<tc>, window_params = [{transform_indices = @transform_0, window_bounds = array<i64: 8, 2019>}, {pipeline_mode = #tpu.pipeline_mode<synchronous>, transform_indices = @transform_1, window_bounds = array<i64: 2019, 256>}, {pipeline_mode = #tpu.pipeline_mode<synchronous>, transform_indices = @transform_2, window_bounds = array<i64: 1, 256>}, {pipeline_mode = #tpu.pipeline_mode<synchronous>, transform_indices = @transform_3, window_bounds = array<i64: 256, 128>}, {pipeline_mode = #tpu.pipeline_mode<synchronous>, transform_indices = @transform_4, window_bounds = array<i64: 1, 128>}, {pipeline_mode = #tpu.pipeline_mode<synchronous>, transform_indices = @transform_5, window_bounds = array<i64: 128, 64>}, {pipeline_mode = #tpu.pipeline_mode<synchronous>, transform_indices = @transform_6, window_bounds = array<i64: 1, 64>}, {pipeline_mode = #tpu.pipeline_mode<synchronous>, transform_indices = @transform_7, window_bounds = array<i64: 64, 2>}, {pipeline_mode = #tpu.pipeline_mode<synchronous>, transform_indices = @transform_8, window_bounds = array<i64: 1, 2>}, {transform_indices = @transform_9, window_bounds = array<i64: 8, 2>}]} {
    %c0 = arith.constant 0 : index
    %c0_0 = arith.constant 0 : index
    %0 = vector.load %arg1[%c0, %c0_0] : memref<8x2019xf32, #tpu.memory_space<vmem>>, vector<8x2019xf32>
    %1 = arith.truncf %0 : vector<8x2019xf32> to vector<8x2019xbf16>
    %c0_1 = arith.constant 0 : index
    %c0_2 = arith.constant 0 : index
    %2 = vector.load %arg2[%c0_1, %c0_2] : memref<2019x256xbf16, #tpu.memory_space<vmem>>, vector<2019x256xbf16>
    %cst = arith.constant dense<0.000000e+00> : vector<8x256xf32>
    %3 = tpu.matmul %1, %2, %cst {dimension_numbers = #tpu.dot_dimension_numbers<[1], [0], [0], [1], [0, 0, 1, 1], [], []>} : vector<8x2019xbf16>, vector<2019x256xbf16>, vector<8x256xf32> -> vector<8x256xf32>
    %c0_3 = arith.constant 0 : index
    %c0_4 = arith.constant 0 : index
    %4 = vector.load %arg3[%c0_3, %c0_4] : memref<1x256xf32, #tpu.memory_space<vmem>>, vector<1x256xf32>
    %5 = vector.broadcast %4 : vector<1x256xf32> to vector<8x256xf32>
    %6 = arith.addf %3, %5 : vector<8x256xf32>
    %cst_5 = arith.constant 0.000000e+00 : f32
    %7 = vector.broadcast %cst_5 : f32 to vector<8x256xf32>
    %8 = arith.maximumf %6, %7 : vector<8x256xf32>
    %9 = arith.truncf %8 : vector<8x256xf32> to vector<8x256xbf16>
    %c0_6 = arith.constant 0 : index
    %c0_7 = arith.constant 0 : index
    %10 = vector.load %arg4[%c0_6, %c0_7] : memref<256x128xbf16, #tpu.memory_space<vmem>>, vector<256x128xbf16>
    %cst_8 = arith.constant dense<0.000000e+00> : vector<8x128xf32>
    %11 = tpu.matmul %9, %10, %cst_8 {dimension_numbers = #tpu.dot_dimension_numbers<[1], [0], [0], [1], [0, 0, 1, 1], [], []>} : vector<8x256xbf16>, vector<256x128xbf16>, vector<8x128xf32> -> vector<8x128xf32>
    %c0_9 = arith.constant 0 : index
    %c0_10 = arith.constant 0 : index
    %12 = vector.load %arg5[%c0_9, %c0_10] : memref<1x128xf32, #tpu.memory_space<vmem>>, vector<1x128xf32>
    %13 = vector.broadcast %12 : vector<1x128xf32> to vector<8x128xf32>
    %14 = arith.addf %11, %13 : vector<8x128xf32>
    %cst_11 = arith.constant 0.000000e+00 : f32
    %15 = vector.broadcast %cst_11 : f32 to vector<8x128xf32>
    %16 = arith.maximumf %14, %15 : vector<8x128xf32>
    %17 = arith.truncf %16 : vector<8x128xf32> to vector<8x128xbf16>
    %c0_12 = arith.constant 0 : index
    %c0_13 = arith.constant 0 : index
    %18 = vector.load %arg6[%c0_12, %c0_13] : memref<128x64xbf16, #tpu.memory_space<vmem>>, vector<128x64xbf16>
    %cst_14 = arith.constant dense<0.000000e+00> : vector<8x64xf32>
    %19 = tpu.matmul %17, %18, %cst_14 {dimension_numbers = #tpu.dot_dimension_numbers<[1], [0], [0], [1], [0, 0, 1, 1], [], []>} : vector<8x128xbf16>, vector<128x64xbf16>, vector<8x64xf32> -> vector<8x64xf32>
    %c0_15 = arith.constant 0 : index
    %c0_16 = arith.constant 0 : index
    %20 = vector.load %arg7[%c0_15, %c0_16] : memref<1x64xf32, #tpu.memory_space<vmem>>, vector<1x64xf32>
    %21 = vector.broadcast %20 : vector<1x64xf32> to vector<8x64xf32>
    %22 = arith.addf %19, %21 : vector<8x64xf32>
    %cst_17 = arith.constant 0.000000e+00 : f32
    %23 = vector.broadcast %cst_17 : f32 to vector<8x64xf32>
    %24 = arith.maximumf %22, %23 : vector<8x64xf32>
    %25 = arith.truncf %24 : vector<8x64xf32> to vector<8x64xbf16>
    %c0_18 = arith.constant 0 : index
    %c0_19 = arith.constant 0 : index
    %26 = vector.load %arg8[%c0_18, %c0_19] : memref<64x2xbf16, #tpu.memory_space<vmem>>, vector<64x2xbf16>
    %cst_20 = arith.constant dense<0.000000e+00> : vector<8x2xf32>
    %27 = tpu.matmul %25, %26, %cst_20 {dimension_numbers = #tpu.dot_dimension_numbers<[1], [0], [0], [1], [0, 0, 1, 1], [], []>} : vector<8x64xbf16>, vector<64x2xbf16>, vector<8x2xf32> -> vector<8x2xf32>
    %c0_21 = arith.constant 0 : index
    %c0_22 = arith.constant 0 : index
    %28 = vector.load %arg9[%c0_21, %c0_22] : memref<1x2xf32, #tpu.memory_space<vmem>>, vector<1x2xf32>
    %29 = vector.broadcast %28 : vector<1x2xf32> to vector<8x2xf32>
    %30 = arith.addf %27, %29 : vector<8x2xf32>
    %c0_23 = arith.constant 0 : index
    %c0_24 = arith.constant 0 : index
    %31 = vector.load %arg10[%c0_23, %c0_24] : memref<8x2xf32, #tpu.memory_space<vmem>>, vector<8x2xf32>
    tpu.vector_store %arg10[%c0_23, %c0_24], %30 {strides = array<i32>} : memref<8x2xf32, #tpu.memory_space<vmem>>, vector<8x2xf32>,
    return
  }
  func.func @transform_0(%arg0: i32) -> (i32, i32) {
    %c0_i32 = arith.constant 0 : i32
    %c0_i32_0 = arith.constant 0 : i32
    return %arg0, %c0_i32 : i32, i32
  }
  func.func @transform_1(%arg0: i32) -> (i32, i32) {
    %c0_i32 = arith.constant 0 : i32
    %c0_i32_0 = arith.constant 0 : i32
    %c0_i32_1 = arith.constant 0 : i32
    return %c0_i32, %c0_i32_0 : i32, i32
  }
  func.func @transform_2(%arg0: i32) -> (i32, i32) {
    %c0_i32 = arith.constant 0 : i32
    %c0_i32_0 = arith.constant 0 : i32
    %c0_i32_1 = arith.constant 0 : i32
    return %c0_i32, %c0_i32_0 : i32, i32
  }
  func.func @transform_3(%arg0: i32) -> (i32, i32) {
    %c0_i32 = arith.constant 0 : i32
    %c0_i32_0 = arith.constant 0 : i32
    %c0_i32_1 = arith.constant 0 : i32
    return %c0_i32, %c0_i32_0 : i32, i32
  }
  func.func @transform_4(%arg0: i32) -> (i32, i32) {
    %c0_i32 = arith.constant 0 : i32
    %c0_i32_0 = arith.constant 0 : i32
    %c0_i32_1 = arith.constant 0 : i32
    return %c0_i32, %c0_i32_0 : i32, i32
  }
  func.func @transform_5(%arg0: i32) -> (i32, i32) {
    %c0_i32 = arith.constant 0 : i32
    %c0_i32_0 = arith.constant 0 : i32
    %c0_i32_1 = arith.constant 0 : i32
    return %c0_i32, %c0_i32_0 : i32, i32
  }
  func.func @transform_6(%arg0: i32) -> (i32, i32) {
    %c0_i32 = arith.constant 0 : i32
    %c0_i32_0 = arith.constant 0 : i32
    %c0_i32_1 = arith.constant 0 : i32
    return %c0_i32, %c0_i32_0 : i32, i32
  }
  func.func @transform_7(%arg0: i32) -> (i32, i32) {
    %c0_i32 = arith.constant 0 : i32
    %c0_i32_0 = arith.constant 0 : i32
    %c0_i32_1 = arith.constant 0 : i32
    return %c0_i32, %c0_i32_0 : i32, i32
  }
  func.func @transform_8(%arg0: i32) -> (i32, i32) {
    %c0_i32 = arith.constant 0 : i32
    %c0_i32_0 = arith.constant 0 : i32
    %c0_i32_1 = arith.constant 0 : i32
    return %c0_i32, %c0_i32_0 : i32, i32
  }
  func.func @transform_9(%arg0: i32) -> (i32, i32) {
    %c0_i32 = arith.constant 0 : i32
    %c0_i32_0 = arith.constant 0 : i32
    return %arg0, %c0_i32 : i32, i32
  }
}

</mosaic_0001>

<llo_original>
// kernel: ann_forward.1
$region0: #{ann_forward.1}
  #allocation0 [shape = 'u32[]', space=smem, size = 0x4, offset = 0x4, fixed_abs, tag = 'smem constant byte address 0x4 - core index']
  #allocation1 [shape = 'u32[144,128]{1,0:T(1,128)}', space=vmem, size = 0x12000, scoped, tag = 'internal scratch']
  %s0 = inlined_call_operand.vmem [shape: f32[8,2019], index: 0, kind: input, shape index: {}]
  %s1 = inlined_call_operand.hbm [shape: bf16[2019,256], index: 1, kind: input, shape index: {}]
  %s2 = inlined_call_operand.vmem [shape: f32[1,256], index: 2, kind: input, shape index: {}]
  %s3 = inlined_call_operand.hbm [shape: bf16[256,128], index: 3, kind: input, shape index: {}]
  %s4 = inlined_call_operand.vmem [shape: f32[1,128], index: 4, kind: input, shape index: {}]
  %s5 = inlined_call_operand.vmem [shape: bf16[128,64], index: 5, kind: input, shape index: {}]
  %s6 = inlined_call_operand.vmem [shape: f32[1,64], index: 6, kind: input, shape index: {}]
  %s7 = inlined_call_operand.vmem [shape: bf16[64,2], index: 7, kind: input, shape index: {}]
  %s8 = inlined_call_operand.vmem [shape: f32[1,2], index: 8, kind: input, shape index: {}]
  %s9 = inlined_call_operand.vmem [shape: f32[8,2], index: 9, kind: output, shape index: {}]
  %s10 = sld [smem:[#allocation0]]
  $region54: #{ann_forward.1} parent=0
    _
  %s12 = ssub.s32 1, %s10
  %s13 = scalar_select 0, %s12, %s10
  $region1: #{ann_forward.1} parent=0
    #allocation2 [shape = 'u8[1036288]{0}', space=vmem, size = 0xfd000, scoped, tag = 'input window, operand 1, single buffered']
    #allocation3 [shape = 's32[1]{0}', space=sflag, size = 0x4, scoped, tag = 'scoped memory for ann_forward.1']
    #allocation4 [shape = 'u8[65536]{0}', space=vmem, size = 0x10000, scoped, tag = 'input window, operand 3, single buffered']
    #allocation5 [shape = 's32[1]{0}', space=sflag, size = 0x4, scoped, tag = 'scoped memory for ann_forward.1']
    %14 = vsyncpa [#allocation3], 0
    %15 = vsyncpa [#allocation5], 0
    // Predicated region
    $region2: #{ann_forward.1} parent=1 // pred_check
      _
    $region3: #{ann_forward.1} parent=1 // pred_check_branch
      %17 = sbr.rel (0) target = $region5
    $region4: #{ann_forward.1} parent=1 // pred_region
      _
    $region5: #{ann_forward.1} parent=1 // pred_fallthru
      _
    // Predicated region
    $region6: #{ann_forward.1} parent=1 // pred_check
      _
    $region7: #{ann_forward.1} parent=1 // pred_check_branch
      %19 = sbr.rel (0) target = $region9
    $region8: #{ann_forward.1} parent=1 // pred_region
      %s21 = ssub.s32 32384, 32384
      %22 = vsyncadd [#allocation3], %s21
      %s23 = sshll.u32 [#allocation2], 4
      %s24 = int_to_ptr.vmem [resolvable:$true] %s23
      %29 = dma.hbm_to_vmem [thread:$0]  %s1, 32384, %s24, [#allocation3], 128, 128, 8
    $region9: #{ann_forward.1} parent=1 // pred_fallthru
      _
    // Predicated region
    $region10: #{ann_forward.1} parent=1 // pred_check
      _
    $region11: #{ann_forward.1} parent=1 // pred_check_branch
      %31 = sbr.rel (0) target = $region13
    $region12: #{ann_forward.1} parent=1 // pred_region
      _
    $region13: #{ann_forward.1} parent=1 // pred_fallthru
      _
    // Predicated region
    $region14: #{ann_forward.1} parent=1 // pred_check
      _
    $region15: #{ann_forward.1} parent=1 // pred_check_branch
      %33 = sbr.rel (0) target = $region17
    $region16: #{ann_forward.1} parent=1 // pred_region
      %s35 = ssub.s32 2048, 2048
      %36 = vsyncadd [#allocation5], %s35
      %s37 = sshll.u32 [#allocation4], 4
      %s38 = int_to_ptr.vmem [resolvable:$true] %s37
      %43 = dma.hbm_to_vmem [thread:$0]  %s3, 2048, %s38, [#allocation5], 64, 64, 4
    $region17: #{ann_forward.1} parent=1 // pred_fallthru
      _
    // Predicated region
    $region18: #{ann_forward.1} parent=1 // pred_check
      _
    $region19: #{ann_forward.1} parent=1 // pred_check_branch
      %45 = sbr.rel (0) target = $region21
    $region20: #{ann_forward.1} parent=1 // pred_region
      _
    $region21: #{ann_forward.1} parent=1 // pred_fallthru
      _
    // Predicated region
    $region22: #{ann_forward.1} parent=1 // pred_check
      _
    $region23: #{ann_forward.1} parent=1 // pred_check_branch
      %47 = sbr.rel (0) target = $region25
    $region24: #{ann_forward.1} parent=1 // pred_region
      _
    $region25: #{ann_forward.1} parent=1 // pred_fallthru
      _
    // Predicated region
    $region26: #{ann_forward.1} parent=1 // pred_check
      _
    $region27: #{ann_forward.1} parent=1 // pred_check_branch
      %49 = sbr.rel (0) target = $region29
    $region28: #{ann_forward.1} parent=1 // pred_region
      _
    $region29: #{ann_forward.1} parent=1 // pred_fallthru
      _
    // Predicated region
    $region30: #{ann_forward.1} parent=1 // pred_check
      _
    $region31: #{ann_forward.1} parent=1 // pred_check_branch
      %51 = sbr.rel (0) target = $region33
    $region32: #{ann_forward.1} parent=1 // pred_region
      _
    $region33: #{ann_forward.1} parent=1 // pred_fallthru
      _
    // Predicated region
    $region34: #{ann_forward.1} parent=1 // pred_check
      _
    $region35: #{ann_forward.1} parent=1 // pred_check_branch
      %53 = sbr.rel (0) target = $region37
    $region36: #{ann_forward.1} parent=1 // pred_region
      _
    $region37: #{ann_forward.1} parent=1 // pred_fallthru
      _
    // Predicated region
    $region38: #{ann_forward.1} parent=1 // pred_check
      _
    $region39: #{ann_forward.1} parent=1 // pred_check_branch
      %55 = sbr.rel (0) target = $region41
    $region40: #{ann_forward.1} parent=1 // pred_region
      %56 = dma.done [#allocation3], 32384
    $region41: #{ann_forward.1} parent=1 // pred_fallthru
      _
    // Predicated region
    $region42: #{ann_forward.1} parent=1 // pred_check
      _
    $region43: #{ann_forward.1} parent=1 // pred_check_branch
      %58 = sbr.rel (0) target = $region45
    $region44: #{ann_forward.1} parent=1 // pred_region
      %59 = dma.done [#allocation5], 2048
    $region45: #{ann_forward.1} parent=1 // pred_fallthru
      _
    %v61 = vld [vmem:[%s0] sm:$0xff]
    %v62 = vld [vmem:[%s0 + $0x8] sm:$0xff]
    %v63 = vld [vmem:[%s0 + $0x10] sm:$0xff]
    %v64 = vld [vmem:[%s0 + $0x18] sm:$0xff]
    %v65 = vld [vmem:[%s0 + $0x20] sm:$0xff]
    %v66 = vld [vmem:[%s0 + $0x28] sm:$0xff]
    %v67 = vld [vmem:[%s0 + $0x30] sm:$0xff]
    %v68 = vld [vmem:[%s0 + $0x38] sm:$0xff]
    %v69 = vld [vmem:[%s0 + $0x40] sm:$0xff]
    %v70 = vld [vmem:[%s0 + $0x48] sm:$0xff]
    %v71 = vld [vmem:[%s0 + $0x50] sm:$0xff]
    %v72 = vld [vmem:[%s0 + $0x58] sm:$0xff]
    %v73 = vld [vmem:[%s0 + $0x60] sm:$0xff]
    %v74 = vld [vmem:[%s0 + $0x68] sm:$0xff]
    %v75 = vld [vmem:[%s0 + $0x70] sm:$0xff]
    %v76 = vld [vmem:[%s0 + $0x78] sm:$0xff]
    %v77 = vpack.c.bf16 %v61, %v61
    %v78 = vpack.c.bf16 %v62, %v62
    %v79 = vpack.c.bf16 %v63, %v63
    %v80 = vpack.c.bf16 %v64, %v64
    %v81 = vpack.c.bf16 %v65, %v65
    %v82 = vpack.c.bf16 %v66, %v66
    %v83 = vpack.c.bf16 %v67, %v67
    %v84 = vpack.c.bf16 %v68, %v68
    %v85 = vpack.c.bf16 %v69, %v69
    %v86 = vpack.c.bf16 %v70, %v70
    %v87 = vpack.c.bf16 %v71, %v71
    %v88 = vpack.c.bf16 %v72, %v72
    %v89 = vpack.c.bf16 %v73, %v73
    %v90 = vpack.c.bf16 %v74, %v74
    %v91 = vpack.c.bf16 %v75, %v75
    %v92 = vpack.c.bf16 %v76, %v76
    %v93 = vld [vmem:[#allocation2] sm:$0xff]
    %v94 = vld [vmem:[#allocation2 + $0x8] sm:$0xff]
    %v95 = vld [vmem:[#allocation2 + $0x10] sm:$0xff]
    %v96 = vld [vmem:[#allocation2 + $0x18] sm:$0xff]
    %v97 = vld [vmem:[#allocation2 + $0x20] sm:$0xff]
    %v98 = vld [vmem:[#allocation2 + $0x28] sm:$0xff]
    %v99 = vld [vmem:[#allocation2 + $0x30] sm:$0xff]
    %v100 = vld [vmem:[#allocation2 + $0x38] sm:$0xff]
    %v101 = vld [vmem:[#allocation2 + $0x40] sm:$0xff]
    %v102 = vld [vmem:[#allocation2 + $0x48] sm:$0xff]
    %v103 = vld [vmem:[#allocation2 + $0x50] sm:$0xff]
    %v104 = vld [vmem:[#allocation2 + $0x58] sm:$0xff]
    %v105 = vld [vmem:[#allocation2 + $0x60] sm:$0xff]
    %v106 = vld [vmem:[#allocation2 + $0x68] sm:$0xff]
    %v107 = vld [vmem:[#allocation2 + $0x70] sm:$0xff]
    %v108 = vld [vmem:[#allocation2 + $0x78] sm:$0xff]
    %v109 = vld [vmem:[#allocation2 + $0x80] sm:$0xff]
    %v110 = vld [vmem:[#allocation2 + $0x88] sm:$0xff]
    %v111 = vld [vmem:[#allocation2 + $0x90] sm:$0xff]
    %v112 = vld [vmem:[#allocation2 + $0x98] sm:$0xff]
    %v113 = vld [vmem:[#allocation2 + $0xa0] sm:$0xff]
    %v114 = vld [vmem:[#allocation2 + $0xa8] sm:$0xff]
    %v115 = vld [vmem:[#allocation2 + $0xb0] sm:$0xff]
    %v116 = vld [vmem:[#allocation2 + $0xb8] sm:$0xff]
    %v117 = vld [vmem:[#allocation2 + $0xc0] sm:$0xff]
    %v118 = vld [vmem:[#allocation2 + $0xc8] sm:$0xff]
    %v119 = vld [vmem:[#allocation2 + $0xd0] sm:$0xff]
    %v120 = vld [vmem:[#allocation2 + $0xd8] sm:$0xff]
    %v121 = vld [vmem:[#allocation2 + $0xe0] sm:$0xff]
    %v122 = vld [vmem:[#allocation2 + $0xe8] sm:$0xff]
    %v123 = vld [vmem:[#allocation2 + $0xf0] sm:$0xff]
    %v124 = vld [vmem:[#allocation2 + $0xf8] sm:$0xff]
    %v125 = vld [vmem:[#allocation2 + $0x100] sm:$0xff]
    %v126 = vld [vmem:[#allocation2 + $0x108] sm:$0xff]
    %v127 = vld [vmem:[#allocation2 + $0x110] sm:$0xff]
    %v128 = vld [vmem:[#allocation2 + $0x118] sm:$0xff]
    %v129 = vld [vmem:[#allocation2 + $0x120] sm:$0xff]
    %v130 = vld [vmem:[#allocation2 + $0x128] sm:$0xff]
    %v131 = vld [vmem:[#allocation2 + $0x130] sm:$0xff]
    %v132 = vld [vmem:[#allocation2 + $0x138] sm:$0xff]
    %v133 = vld [vmem:[#allocation2 + $0x140] sm:$0xff]
    %v134 = vld [vmem:[#allocation2 + $0x148] sm:$0xff]
    %v135 = vld [vmem:[#allocation2 + $0x150] sm:$0xff]
    %v136 = vld [vmem:[#allocation2 + $0x158] sm:$0xff]
    %v137 = vld [vmem:[#allocation2 + $0x160] sm:$0xff]
    %v138 = vld [vmem:[#allocation2 + $0x168] sm:$0xff]
    %v139 = vld [vmem:[#allocation2 + $0x170] sm:$0xff]
    %v140 = vld [vmem:[#allocation2 + $0x178] sm:$0xff]
    %v141 = vld [vmem:[#allocation2 + $0x180] sm:$0xff]
    %v142 = vld [vmem:[#allocation2 + $0x188] sm:$0xff]
    %v143 = vld [vmem:[#allocation2 + $0x190] sm:$0xff]
    %v144 = vld [vmem:[#allocation2 + $0x198] sm:$0xff]
    %v145 = vld [vmem:[#allocation2 + $0x1a0] sm:$0xff]
    %v146 = vld [vmem:[#allocation2 + $0x1a8] sm:$0xff]
    %v147 = vld [vmem:[#allocation2 + $0x1b0] sm:$0xff]
    %v148 = vld [vmem:[#allocation2 + $0x1b8] sm:$0xff]
    %v149 = vld [vmem:[#allocation2 + $0x1c0] sm:$0xff]
    %v150 = vld [vmem:[#allocation2 + $0x1c8] sm:$0xff]
    %v151 = vld [vmem:[#allocation2 + $0x1d0] sm:$0xff]
    %v152 = vld [vmem:[#allocation2 + $0x1d8] sm:$0xff]
    %v153 = vld [vmem:[#allocation2 + $0x1e0] sm:$0xff]
    %v154 = vld [vmem:[#allocation2 + $0x1e8] sm:$0xff]
    %v155 = vld [vmem:[#allocation2 + $0x1f0] sm:$0xff]
    %v156 = vld [vmem:[#allocation2 + $0x1f8] sm:$0xff]
    %v157 = vld [vmem:[#allocation2 + $0x200] sm:$0xff]
    %v158 = vld [vmem:[#allocation2 + $0x208] sm:$0xff]
    %v159 = vld [vmem:[#allocation2 + $0x210] sm:$0xff]
    %v160 = vld [vmem:[#allocation2 + $0x218] sm:$0xff]
    %v161 = vld [vmem:[#allocation2 + $0x220] sm:$0xff]
    %v162 = vld [vmem:[#allocation2 + $0x228] sm:$0xff]
    %v163 = vld [vmem:[#allocation2 + $0x230] sm:$0xff]
    %v164 = vld [vmem:[#allocation2 + $0x238] sm:$0xff]
    %v165 = vld [vmem:[#allocation2 + $0x240] sm:$0xff]
    %v166 = vld [vmem:[#allocation2 + $0x248] sm:$0xff]
    %v167 = vld [vmem:[#allocation2 + $0x250] sm:$0xff]
    %v168 = vld [vmem:[#allocation2 + $0x258] sm:$0xff]
    %v169 = vld [vmem:[#allocation2 + $0x260] sm:$0xff]
    %v170 = vld [vmem:[#allocation2 + $0x268] sm:$0xff]
    %v171 = vld [vmem:[#allocation2 + $0x270] sm:$0xff]
    %v172 = vld [vmem:[#allocation2 + $0x278] sm:$0xff]
    %v173 = vld [vmem:[#allocation2 + $0x280] sm:$0xff]
    %v174 = vld [vmem:[#allocation2 + $0x288] sm:$0xff]
    %v175 = vld [vmem:[#allocation2 + $0x290] sm:$0xff]
    %v176 = vld [vmem:[#allocation2 + $0x298] sm:$0xff]
    %v177 = vld [vmem:[#allocation2 + $0x2a0] sm:$0xff]
    %v178 = vld [vmem:[#allocation2 + $0x2a8] sm:$0xff]
    %v179 = vld [vmem:[#allocation2 + $0x2b0] sm:$0xff]
    %v180 = vld [vmem:[#allocation2 + $0x2b8] sm:$0xff]
    %v181 = vld [vmem:[#allocation2 + $0x2c0] sm:$0xff]
    %v182 = vld [vmem:[#allocation2 + $0x2c8] sm:$0xff]
    %v183 = vld [vmem:[#allocation2 + $0x2d0] sm:$0xff]
    %v184 = vld [vmem:[#allocation2 + $0x2d8] sm:$0xff]
    %v185 = vld [vmem:[#allocation2 + $0x2e0] sm:$0xff]
    %v186 = vld [vmem:[#allocation2 + $0x2e8] sm:$0xff]
    %v187 = vld [vmem:[#allocation2 + $0x2f0] sm:$0xff]
    %v188 = vld [vmem:[#allocation2 + $0x2f8] sm:$0xff]
    %v189 = vld [vmem:[#allocation2 + $0x300] sm:$0xff]
    %v190 = vld [vmem:[#allocation2 + $0x308] sm:$0xff]
    %v191 = vld [vmem:[#allocation2 + $0x310] sm:$0xff]
    %v192 = vld [vmem:[#allocation2 + $0x318] sm:$0xff]
    %v193 = vld [vmem:[#allocation2 + $0x320] sm:$0xff]
    %v194 = vld [vmem:[#allocation2 + $0x328] sm:$0xff]
    %v195 = vld [vmem:[#allocation2 + $0x330] sm:$0xff]
    %v196 = vld [vmem:[#allocation2 + $0x338] sm:$0xff]
    %v197 = vld [vmem:[#allocation2 + $0x340] sm:$0xff]
    %v198 = vld [vmem:[#allocation2 + $0x348] sm:$0xff]
    %v199 = vld [vmem:[#allocation2 + $0x350] sm:$0xff]
    %v200 = vld [vmem:[#allocation2 + $0x358] sm:$0xff]
    %v201 = vld [vmem:[#allocation2 + $0x360] sm:$0xff]
    %v202 = vld [vmem:[#allocation2 + $0x368] sm:$0xff]
    %v203 = vld [vmem:[#allocation2 + $0x370] sm:$0xff]
    %v204 = vld [vmem:[#allocation2 + $0x378] sm:$0xff]
    %v205 = vld [vmem:[#allocation2 + $0x380] sm:$0xff]
    %v206 = vld [vmem:[#allocation2 + $0x388] sm:$0xff]
    %v207 = vld [vmem:[#allocation2 + $0x390] sm:$0xff]
    %v208 = vld [vmem:[#allocation2 + $0x398] sm:$0xff]
    %v209 = vld [vmem:[#allocation2 + $0x3a0] sm:$0xff]
    %v210 = vld [vmem:[#allocation2 + $0x3a8] sm:$0xff]
    %v211 = vld [vmem:[#allocation2 + $0x3b0] sm:$0xff]
    %v212 = vld [vmem:[#allocation2 + $0x3b8] sm:$0xff]
    %v213 = vld [vmem:[#allocation2 + $0x3c0] sm:$0xff]
    %v214 = vld [vmem:[#allocation2 + $0x3c8] sm:$0xff]
    %v215 = vld [vmem:[#allocation2 + $0x3d0] sm:$0xff]
    %v216 = vld [vmem:[#allocation2 + $0x3d8] sm:$0xff]
    %v217 = vld [vmem:[#allocation2 + $0x3e0] sm:$0xff]
    %v218 = vld [vmem:[#allocation2 + $0x3e8] sm:$0xff]
    %v219 = vld [vmem:[#allocation2 + $0x3f0] sm:$0xff]
    %v220 = vld [vmem:[#allocation2 + $0x3f8] sm:$0xff]
    %v221 = vld [vmem:[#allocation2 + $0x400] sm:$0xff]
    %v222 = vld [vmem:[#allocation2 + $0x408] sm:$0xff]
    %v223 = vld [vmem:[#allocation2 + $0x410] sm:$0xff]
    %v224 = vld [vmem:[#allocation2 + $0x418] sm:$0xff]
    %v225 = vld [vmem:[#allocation2 + $0x420] sm:$0xff]
    %v226 = vld [vmem:[#allocation2 + $0x428] sm:$0xff]
    %v227 = vld [vmem:[#allocation2 + $0x430] sm:$0xff]
    %v228 = vld [vmem:[#allocation2 + $0x438] sm:$0xff]
    %v229 = vld [vmem:[#allocation2 + $0x440] sm:$0xff]
    %v230 = vld [vmem:[#allocation2 + $0x448] sm:$0xff]
    %v231 = vld [vmem:[#allocation2 + $0x450] sm:$0xff]
    %v232 = vld [vmem:[#allocation2 + $0x458] sm:$0xff]
    %v233 = vld [vmem:[#allocation2 + $0x460] sm:$0xff]
    %v234 = vld [vmem:[#allocation2 + $0x468] sm:$0xff]
    %v235 = vld [vmem:[#allocation2 + $0x470] sm:$0xff]
    %v236 = vld [vmem:[#allocation2 + $0x478] sm:$0xff]
    %v237 = vld [vmem:[#allocation2 + $0x480] sm:$0xff]
    %v238 = vld [vmem:[#allocation2 + $0x488] sm:$0xff]
    %v239 = vld [vmem:[#allocation2 + $0x490] sm:$0xff]
    %v240 = vld [vmem:[#allocation2 + $0x498] sm:$0xff]
    %v241 = vld [vmem:[#allocation2 + $0x4a0] sm:$0xff]
    %v242 = vld [vmem:[#allocation2 + $0x4a8] sm:$0xff]
    %v243 = vld [vmem:[#allocation2 + $0x4b0] sm:$0xff]
    %v244 = vld [vmem:[#allocation2 + $0x4b8] sm:$0xff]
    %v245 = vld [vmem:[#allocation2 + $0x4c0] sm:$0xff]
    %v246 = vld [vmem:[#allocation2 + $0x4c8] sm:$0xff]
    %v247 = vld [vmem:[#allocation2 + $0x4d0] sm:$0xff]
    %v248 = vld [vmem:[#allocation2 + $0x4d8] sm:$0xff]
    %v249 = vld [vmem:[#allocation2 + $0x4e0] sm:$0xff]
    %v250 = vld [vmem:[#allocation2 + $0x4e8] sm:$0xff]
    %v251 = vld [vmem:[#allocation2 + $0x4f0] sm:$0xff]
    %v252 = vld [vmem:[#allocation2 + $0x4f8] sm:$0xff]
    %v253 = vld [vmem:[#allocation2 + $0x500] sm:$0xff]
    %v254 = vld [vmem:[#allocation2 + $0x508] sm:$0xff]
    %v255 = vld [vmem:[#allocation2 + $0x510] sm:$0xff]
    %v256 = vld [vmem:[#allocation2 + $0x518] sm:$0xff]
    %v257 = vld [vmem:[#allocation2 + $0x520] sm:$0xff]
    %v258 = vld [vmem:[#allocation2 + $0x528] sm:$0xff]
    %v259 = vld [vmem:[#allocation2 + $0x530] sm:$0xff]
    %v260 = vld [vmem:[#allocation2 + $0x538] sm:$0xff]
    %v261 = vld [vmem:[#allocation2 + $0x540] sm:$0xff]
    %v262 = vld [vmem:[#allocation2 + $0x548] sm:$0xff]
    %v263 = vld [vmem:[#allocation2 + $0x550] sm:$0xff]
    %v264 = vld [vmem:[#allocation2 + $0x558] sm:$0xff]
    %v265 = vld [vmem:[#allocation2 + $0x560] sm:$0xff]
    %v266 = vld [vmem:[#allocation2 + $0x568] sm:$0xff]
    %v267 = vld [vmem:[#allocation2 + $0x570] sm:$0xff]
    %v268 = vld [vmem:[#allocation2 + $0x578] sm:$0xff]
    %v269 = vld [vmem:[#allocation2 + $0x580] sm:$0xff]
    %v270 = vld [vmem:[#allocation2 + $0x588] sm:$0xff]
    %v271 = vld [vmem:[#allocation2 + $0x590] sm:$0xff]
    %v272 = vld [vmem:[#allocation2 + $0x598] sm:$0xff]
    %v273 = vld [vmem:[#allocation2 + $0x5a0] sm:$0xff]
    %v274 = vld [vmem:[#allocation2 + $0x5a8] sm:$0xff]
    %v275 = vld [vmem:[#allocation2 + $0x5b0] sm:$0xff]
    %v276 = vld [vmem:[#allocation2 + $0x5b8] sm:$0xff]
    %v277 = vld [vmem:[#allocation2 + $0x5c0] sm:$0xff]
    %v278 = vld [vmem:[#allocation2 + $0x5c8] sm:$0xff]
    %v279 = vld [vmem:[#allocation2 + $0x5d0] sm:$0xff]
    %v280 = vld [vmem:[#allocation2 + $0x5d8] sm:$0xff]
    %v281 = vld [vmem:[#allocation2 + $0x5e0] sm:$0xff]
    %v282 = vld [vmem:[#allocation2 + $0x5e8] sm:$0xff]
    %v283 = vld [vmem:[#allocation2 + $0x5f0] sm:$0xff]
    %v284 = vld [vmem:[#allocation2 + $0x5f8] sm:$0xff]
    %v285 = vld [vmem:[#allocation2 + $0x600] sm:$0xff]
    %v286 = vld [vmem:[#allocation2 + $0x608] sm:$0xff]
    %v287 = vld [vmem:[#allocation2 + $0x610] sm:$0xff]
    %v288 = vld [vmem:[#allocation2 + $0x618] sm:$0xff]
    %v289 = vld [vmem:[#allocation2 + $0x620] sm:$0xff]
    %v290 = vld [vmem:[#allocation2 + $0x628] sm:$0xff]
    %v291 = vld [vmem:[#allocation2 + $0x630] sm:$0xff]
    %v292 = vld [vmem:[#allocation2 + $0x638] sm:$0xff]
    %v293 = vld [vmem:[#allocation2 + $0x640] sm:$0xff]
    %v294 = vld [vmem:[#allocation2 + $0x648] sm:$0xff]
    %v295 = vld [vmem:[#allocation2 + $0x650] sm:$0xff]
    %v296 = vld [vmem:[#allocation2 + $0x658] sm:$0xff]
    %v297 = vld [vmem:[#allocation2 + $0x660] sm:$0xff]
    %v298 = vld [vmem:[#allocation2 + $0x668] sm:$0xff]
    %v299 = vld [vmem:[#allocation2 + $0x670] sm:$0xff]
    %v300 = vld [vmem:[#allocation2 + $0x678] sm:$0xff]
    %v301 = vld [vmem:[#allocation2 + $0x680] sm:$0xff]
    %v302 = vld [vmem:[#allocation2 + $0x688] sm:$0xff]
    %v303 = vld [vmem:[#allocation2 + $0x690] sm:$0xff]
    %v304 = vld [vmem:[#allocation2 + $0x698] sm:$0xff]
    %v305 = vld [vmem:[#allocation2 + $0x6a0] sm:$0xff]
    %v306 = vld [vmem:[#allocation2 + $0x6a8] sm:$0xff]
    %v307 = vld [vmem:[#allocation2 + $0x6b0] sm:$0xff]
    %v308 = vld [vmem:[#allocation2 + $0x6b8] sm:$0xff]
    %v309 = vld [vmem:[#allocation2 + $0x6c0] sm:$0xff]
    %v310 = vld [vmem:[#allocation2 + $0x6c8] sm:$0xff]
    %v311 = vld [vmem:[#allocation2 + $0x6d0] sm:$0xff]
    %v312 = vld [vmem:[#allocation2 + $0x6d8] sm:$0xff]
    %v313 = vld [vmem:[#allocation2 + $0x6e0] sm:$0xff]
    %v314 = vld [vmem:[#allocation2 + $0x6e8] sm:$0xff]
    %v315 = vld [vmem:[#allocation2 + $0x6f0] sm:$0xff]
    %v316 = vld [vmem:[#allocation2 + $0x6f8] sm:$0xff]
    %v317 = vld [vmem:[#allocation2 + $0x700] sm:$0xff]
    %v318 = vld [vmem:[#allocation2 + $0x708] sm:$0xff]
    %v319 = vld [vmem:[#allocation2 + $0x710] sm:$0xff]
    %v320 = vld [vmem:[#allocation2 + $0x718] sm:$0xff]
    %v321 = vld [vmem:[#allocation2 + $0x720] sm:$0xff]
    %v322 = vld [vmem:[#allocation2 + $0x728] sm:$0xff]
    %v323 = vld [vmem:[#allocation2 + $0x730] sm:$0xff]
    %v324 = vld [vmem:[#allocation2 + $0x738] sm:$0xff]
    %v325 = vld [vmem:[#allocation2 + $0x740] sm:$0xff]
    %v326 = vld [vmem:[#allocation2 + $0x748] sm:$0xff]
    %v327 = vld [vmem:[#allocation2 + $0x750] sm:$0xff]
    %v328 = vld [vmem:[#allocation2 + $0x758] sm:$0xff]
    %v329 = vld [vmem:[#allocation2 + $0x760] sm:$0xff]
    %v330 = vld [vmem:[#allocation2 + $0x768] sm:$0xff]
    %v331 = vld [vmem:[#allocation2 + $0x770] sm:$0xff]
    %v332 = vld [vmem:[#allocation2 + $0x778] sm:$0xff]
    %v333 = vld [vmem:[#allocation2 + $0x780] sm:$0xff]
    %v334 = vld [vmem:[#allocation2 + $0x788] sm:$0xff]
    %v335 = vld [vmem:[#allocation2 + $0x790] sm:$0xff]
    %v336 = vld [vmem:[#allocation2 + $0x798] sm:$0xff]
    %v337 = vld [vmem:[#allocation2 + $0x7a0] sm:$0xff]
    %v338 = vld [vmem:[#allocation2 + $0x7a8] sm:$0xff]
    %v339 = vld [vmem:[#allocation2 + $0x7b0] sm:$0xff]
    %v340 = vld [vmem:[#allocation2 + $0x7b8] sm:$0xff]
    %v341 = vld [vmem:[#allocation2 + $0x7c0] sm:$0xff]
    %v342 = vld [vmem:[#allocation2 + $0x7c8] sm:$0xff]
    %v343 = vld [vmem:[#allocation2 + $0x7d0] sm:$0xff]
    %v344 = vld [vmem:[#allocation2 + $0x7d8] sm:$0xff]
    %v345 = vld [vmem:[#allocation2 + $0x7e0] sm:$0x33]
    %v346 = vld [vmem:[%s2] sm:$0x3]
    %v348 = vlaneseq
    %v349 = vshrl.u32 %v348, 7
    %v350 = vsub.s32 0, %v349
    %v351 = vrot.slane %v346, %v350
    %v352 = vlaneseq
    %v353 = vshrl.u32 %v352, 7
    %v354 = vsub.s32 1, %v353
    %v355 = vrot.slane %v346, %v354
    %v611 = vunpack.c.l.b16 %v93
    %v612 = vunpack.c.h.b16 %v93
    %v613 = vunpack.c.l.b16 %v94
    %v614 = vunpack.c.h.b16 %v94
    %v615 = vunpack.c.l.b16 %v95
    %v616 = vunpack.c.h.b16 %v95
    %v617 = vunpack.c.l.b16 %v96
    %v618 = vunpack.c.h.b16 %v96
    %v619 = vunpack.c.l.b16 %v97
    %v620 = vunpack.c.h.b16 %v97
    %v621 = vunpack.c.l.b16 %v98
    %v622 = vunpack.c.h.b16 %v98
    %v623 = vunpack.c.l.b16 %v99
    %v624 = vunpack.c.h.b16 %v99
    %v625 = vunpack.c.l.b16 %v100
    %v626 = vunpack.c.h.b16 %v100
    %v627 = vunpack.c.l.b16 %v101
    %v628 = vunpack.c.h.b16 %v101
    %v629 = vunpack.c.l.b16 %v102
    %v630 = vunpack.c.h.b16 %v102
    %v631 = vunpack.c.l.b16 %v103
    %v632 = vunpack.c.h.b16 %v103
    %v633 = vunpack.c.l.b16 %v104
    %v634 = vunpack.c.h.b16 %v104
    %v635 = vunpack.c.l.b16 %v105
    %v636 = vunpack.c.h.b16 %v105
    %v637 = vunpack.c.l.b16 %v106
    %v638 = vunpack.c.h.b16 %v106
    %v639 = vunpack.c.l.b16 %v107
    %v640 = vunpack.c.h.b16 %v107
    %v641 = vunpack.c.l.b16 %v108
    %v642 = vunpack.c.h.b16 %v108
    %v643 = vunpack.c.l.b16 %v109
    %v644 = vunpack.c.h.b16 %v109
    %v645 = vunpack.c.l.b16 %v110
    %v646 = vunpack.c.h.b16 %v110
    %v647 = vunpack.c.l.b16 %v111
    %v648 = vunpack.c.h.b16 %v111
    %v649 = vunpack.c.l.b16 %v112
    %v650 = vunpack.c.h.b16 %v112
    %v651 = vunpack.c.l.b16 %v113
    %v652 = vunpack.c.h.b16 %v113
    %v653 = vunpack.c.l.b16 %v114
    %v654 = vunpack.c.h.b16 %v114
    %v655 = vunpack.c.l.b16 %v115
    %v656 = vunpack.c.h.b16 %v115
    %v657 = vunpack.c.l.b16 %v116
    %v658 = vunpack.c.h.b16 %v116
    %v659 = vunpack.c.l.b16 %v117
    %v660 = vunpack.c.h.b16 %v117
    %v661 = vunpack.c.l.b16 %v118
    %v662 = vunpack.c.h.b16 %v118
    %v663 = vunpack.c.l.b16 %v119
    %v664 = vunpack.c.h.b16 %v119
    %v665 = vunpack.c.l.b16 %v120
    %v666 = vunpack.c.h.b16 %v120
    %v667 = vunpack.c.l.b16 %v121
    %v668 = vunpack.c.h.b16 %v121
    %v669 = vunpack.c.l.b16 %v122
    %v670 = vunpack.c.h.b16 %v122
    %v671 = vunpack.c.l.b16 %v123
    %v672 = vunpack.c.h.b16 %v123
    %v673 = vunpack.c.l.b16 %v124
    %v674 = vunpack.c.h.b16 %v124
    %v675 = vunpack.c.l.b16 %v125
    %v676 = vunpack.c.h.b16 %v125
    %v677 = vunpack.c.l.b16 %v126
    %v678 = vunpack.c.h.b16 %v126
    %v679 = vunpack.c.l.b16 %v127
    %v680 = vunpack.c.h.b16 %v127
    %v681 = vunpack.c.l.b16 %v128
    %v682 = vunpack.c.h.b16 %v128
    %v683 = vunpack.c.l.b16 %v129
    %v684 = vunpack.c.h.b16 %v129
    %v685 = vunpack.c.l.b16 %v130
    %v686 = vunpack.c.h.b16 %v130
    %v687 = vunpack.c.l.b16 %v131
    %v688 = vunpack.c.h.b16 %v131
    %v689 = vunpack.c.l.b16 %v132
    %v690 = vunpack.c.h.b16 %v132
    %v691 = vunpack.c.l.b16 %v133
    %v692 = vunpack.c.h.b16 %v133
    %v693 = vunpack.c.l.b16 %v134
    %v694 = vunpack.c.h.b16 %v134
    %v695 = vunpack.c.l.b16 %v135
    %v696 = vunpack.c.h.b16 %v135
    %v697 = vunpack.c.l.b16 %v136
    %v698 = vunpack.c.h.b16 %v136
    %v699 = vunpack.c.l.b16 %v137
    %v700 = vunpack.c.h.b16 %v137
    %v701 = vunpack.c.l.b16 %v138
    %v702 = vunpack.c.h.b16 %v138
    %v703 = vunpack.c.l.b16 %v139
    %v704 = vunpack.c.h.b16 %v139
    %v705 = vunpack.c.l.b16 %v140
    %v706 = vunpack.c.h.b16 %v140
    %v707 = vunpack.c.l.b16 %v141
    %v708 = vunpack.c.h.b16 %v141
    %v709 = vunpack.c.l.b16 %v142
    %v710 = vunpack.c.h.b16 %v142
    %v711 = vunpack.c.l.b16 %v143
    %v712 = vunpack.c.h.b16 %v143
    %v713 = vunpack.c.l.b16 %v144
    %v714 = vunpack.c.h.b16 %v144
    %v715 = vunpack.c.l.b16 %v145
    %v716 = vunpack.c.h.b16 %v145
    %v717 = vunpack.c.l.b16 %v146
    %v718 = vunpack.c.h.b16 %v146
    %v719 = vunpack.c.l.b16 %v147
    %v720 = vunpack.c.h.b16 %v147
    %v721 = vunpack.c.l.b16 %v148
    %v722 = vunpack.c.h.b16 %v148
    %v723 = vunpack.c.l.b16 %v149
    %v724 = vunpack.c.h.b16 %v149
    %v725 = vunpack.c.l.b16 %v150
    %v726 = vunpack.c.h.b16 %v150
    %v727 = vunpack.c.l.b16 %v151
    %v728 = vunpack.c.h.b16 %v151
    %v729 = vunpack.c.l.b16 %v152
    %v730 = vunpack.c.h.b16 %v152
    %v731 = vunpack.c.l.b16 %v153
    %v732 = vunpack.c.h.b16 %v153
    %v733 = vunpack.c.l.b16 %v154
    %v734 = vunpack.c.h.b16 %v154
    %v735 = vunpack.c.l.b16 %v155
    %v736 = vunpack.c.h.b16 %v155
    %v737 = vunpack.c.l.b16 %v156
    %v738 = vunpack.c.h.b16 %v156
    %v739 = vunpack.c.l.b16 %v157
    %v740 = vunpack.c.h.b16 %v157
    %v741 = vunpack.c.l.b16 %v158
    %v742 = vunpack.c.h.b16 %v158
    %v743 = vunpack.c.l.b16 %v159
    %v744 = vunpack.c.h.b16 %v159
    %v745 = vunpack.c.l.b16 %v160
    %v746 = vunpack.c.h.b16 %v160
    %v747 = vunpack.c.l.b16 %v161
    %v748 = vunpack.c.h.b16 %v161
    %v749 = vunpack.c.l.b16 %v162
    %v750 = vunpack.c.h.b16 %v162
    %v751 = vunpack.c.l.b16 %v163
    %v752 = vunpack.c.h.b16 %v163
    %v753 = vunpack.c.l.b16 %v164
    %v754 = vunpack.c.h.b16 %v164
    %v755 = vunpack.c.l.b16 %v165
    %v756 = vunpack.c.h.b16 %v165
    %v757 = vunpack.c.l.b16 %v166
    %v758 = vunpack.c.h.b16 %v166
    %v759 = vunpack.c.l.b16 %v167
    %v760 = vunpack.c.h.b16 %v167
    %v761 = vunpack.c.l.b16 %v168
    %v762 = vunpack.c.h.b16 %v168
    %v763 = vunpack.c.l.b16 %v169
    %v764 = vunpack.c.h.b16 %v169
    %v765 = vunpack.c.l.b16 %v170
    %v766 = vunpack.c.h.b16 %v170
    %v767 = vunpack.c.l.b16 %v171
    %v768 = vunpack.c.h.b16 %v171
    %v769 = vunpack.c.l.b16 %v172
    %v770 = vunpack.c.h.b16 %v172
    %v771 = vunpack.c.l.b16 %v173
    %v772 = vunpack.c.h.b16 %v173
    %v773 = vunpack.c.l.b16 %v174
    %v774 = vunpack.c.h.b16 %v174
    %v775 = vunpack.c.l.b16 %v175
    %v776 = vunpack.c.h.b16 %v175
    %v777 = vunpack.c.l.b16 %v176
    %v778 = vunpack.c.h.b16 %v176
    %v779 = vunpack.c.l.b16 %v177
    %v780 = vunpack.c.h.b16 %v177
    %v781 = vunpack.c.l.b16 %v178
    %v782 = vunpack.c.h.b16 %v178
    %v783 = vunpack.c.l.b16 %v179
    %v784 = vunpack.c.h.b16 %v179
    %v785 = vunpack.c.l.b16 %v180
    %v786 = vunpack.c.h.b16 %v180
    %v787 = vunpack.c.l.b16 %v181
    %v788 = vunpack.c.h.b16 %v181
    %v789 = vunpack.c.l.b16 %v182
    %v790 = vunpack.c.h.b16 %v182
    %v791 = vunpack.c.l.b16 %v183
    %v792 = vunpack.c.h.b16 %v183
    %v793 = vunpack.c.l.b16 %v184
    %v794 = vunpack.c.h.b16 %v184
    %v795 = vunpack.c.l.b16 %v185
    %v796 = vunpack.c.h.b16 %v185
    %v797 = vunpack.c.l.b16 %v186
    %v798 = vunpack.c.h.b16 %v186
    %v799 = vunpack.c.l.b16 %v187
    %v800 = vunpack.c.h.b16 %v187
    %v801 = vunpack.c.l.b16 %v188
    %v802 = vunpack.c.h.b16 %v188
    %v803 = vunpack.c.l.b16 %v189
    %v804 = vunpack.c.h.b16 %v189
    %v805 = vunpack.c.l.b16 %v190
    %v806 = vunpack.c.h.b16 %v190
    %v807 = vunpack.c.l.b16 %v191
    %v808 = vunpack.c.h.b16 %v191
    %v809 = vunpack.c.l.b16 %v192
    %v810 = vunpack.c.h.b16 %v192
    %v811 = vunpack.c.l.b16 %v193
    %v812 = vunpack.c.h.b16 %v193
    %v813 = vunpack.c.l.b16 %v194
    %v814 = vunpack.c.h.b16 %v194
    %v815 = vunpack.c.l.b16 %v195
    %v816 = vunpack.c.h.b16 %v195
    %v817 = vunpack.c.l.b16 %v196
    %v818 = vunpack.c.h.b16 %v196
    %v819 = vunpack.c.l.b16 %v197
    %v820 = vunpack.c.h.b16 %v197
    %v821 = vunpack.c.l.b16 %v198
    %v822 = vunpack.c.h.b16 %v198
    %v823 = vunpack.c.l.b16 %v199
    %v824 = vunpack.c.h.b16 %v199
    %v825 = vunpack.c.l.b16 %v200
    %v826 = vunpack.c.h.b16 %v200
    %v827 = vunpack.c.l.b16 %v201
    %v828 = vunpack.c.h.b16 %v201
    %v829 = vunpack.c.l.b16 %v202
    %v830 = vunpack.c.h.b16 %v202
    %v831 = vunpack.c.l.b16 %v203
    %v832 = vunpack.c.h.b16 %v203
    %v833 = vunpack.c.l.b16 %v204
    %v834 = vunpack.c.h.b16 %v204
    %v835 = vunpack.c.l.b16 %v205
    %v836 = vunpack.c.h.b16 %v205
    %v837 = vunpack.c.l.b16 %v206
    %v838 = vunpack.c.h.b16 %v206
    %v839 = vunpack.c.l.b16 %v207
    %v840 = vunpack.c.h.b16 %v207
    %v841 = vunpack.c.l.b16 %v208
    %v842 = vunpack.c.h.b16 %v208
    %v843 = vunpack.c.l.b16 %v209
    %v844 = vunpack.c.h.b16 %v209
    %v845 = vunpack.c.l.b16 %v210
    %v846 = vunpack.c.h.b16 %v210
    %v847 = vunpack.c.l.b16 %v211
    %v848 = vunpack.c.h.b16 %v211
    %v849 = vunpack.c.l.b16 %v212
    %v850 = vunpack.c.h.b16 %v212
    %v851 = vunpack.c.l.b16 %v213
    %v852 = vunpack.c.h.b16 %v213
    %v853 = vunpack.c.l.b16 %v214
    %v854 = vunpack.c.h.b16 %v214
    %v855 = vunpack.c.l.b16 %v215
    %v856 = vunpack.c.h.b16 %v215
    %v857 = vunpack.c.l.b16 %v216
    %v858 = vunpack.c.h.b16 %v216
    %v859 = vunpack.c.l.b16 %v217
    %v860 = vunpack.c.h.b16 %v217
    %v861 = vunpack.c.l.b16 %v218
    %v862 = vunpack.c.h.b16 %v218
    %v863 = vunpack.c.l.b16 %v219
    %v864 = vunpack.c.h.b16 %v219
    %v865 = vunpack.c.l.b16 %v220
    %v866 = vunpack.c.h.b16 %v220
    %v867 = vunpack.c.l.b16 %v221
    %v868 = vunpack.c.h.b16 %v221
    %v869 = vunpack.c.l.b16 %v222
    %v870 = vunpack.c.h.b16 %v222
    %v871 = vunpack.c.l.b16 %v223
    %v872 = vunpack.c.h.b16 %v223
    %v873 = vunpack.c.l.b16 %v224
    %v874 = vunpack.c.h.b16 %v224
    %v875 = vunpack.c.l.b16 %v225
    %v876 = vunpack.c.h.b16 %v225
    %v877 = vunpack.c.l.b16 %v226
    %v878 = vunpack.c.h.b16 %v226
    %v879 = vunpack.c.l.b16 %v227
    %v880 = vunpack.c.h.b16 %v227
    %v881 = vunpack.c.l.b16 %v228
    %v882 = vunpack.c.h.b16 %v228
    %v883 = vunpack.c.l.b16 %v229
    %v884 = vunpack.c.h.b16 %v229
    %v885 = vunpack.c.l.b16 %v230
    %v886 = vunpack.c.h.b16 %v230
    %v887 = vunpack.c.l.b16 %v231
    %v888 = vunpack.c.h.b16 %v231
    %v889 = vunpack.c.l.b16 %v232
    %v890 = vunpack.c.h.b16 %v232
    %v891 = vunpack.c.l.b16 %v233
    %v892 = vunpack.c.h.b16 %v233
    %v893 = vunpack.c.l.b16 %v234
    %v894 = vunpack.c.h.b16 %v234
    %v895 = vunpack.c.l.b16 %v235
    %v896 = vunpack.c.h.b16 %v235
    %v897 = vunpack.c.l.b16 %v236
    %v898 = vunpack.c.h.b16 %v236
    %v899 = vunpack.c.l.b16 %v237
    %v900 = vunpack.c.h.b16 %v237
    %v901 = vunpack.c.l.b16 %v238
    %v902 = vunpack.c.h.b16 %v238
    %v903 = vunpack.c.l.b16 %v239
    %v904 = vunpack.c.h.b16 %v239
    %v905 = vunpack.c.l.b16 %v240
    %v906 = vunpack.c.h.b16 %v240
    %v907 = vunpack.c.l.b16 %v241
    %v908 = vunpack.c.h.b16 %v241
    %v909 = vunpack.c.l.b16 %v242
    %v910 = vunpack.c.h.b16 %v242
    %v911 = vunpack.c.l.b16 %v243
    %v912 = vunpack.c.h.b16 %v243
    %v913 = vunpack.c.l.b16 %v244
    %v914 = vunpack.c.h.b16 %v244
    %v915 = vunpack.c.l.b16 %v245
    %v916 = vunpack.c.h.b16 %v245
    %v917 = vunpack.c.l.b16 %v246
    %v918 = vunpack.c.h.b16 %v246
    %v919 = vunpack.c.l.b16 %v247
    %v920 = vunpack.c.h.b16 %v247
    %v921 = vunpack.c.l.b16 %v248
    %v922 = vunpack.c.h.b16 %v248
    %v923 = vunpack.c.l.b16 %v249
    %v924 = vunpack.c.h.b16 %v249
    %v925 = vunpack.c.l.b16 %v250
    %v926 = vunpack.c.h.b16 %v250
    %v927 = vunpack.c.l.b16 %v251
    %v928 = vunpack.c.h.b16 %v251
    %v929 = vunpack.c.l.b16 %v252
    %v930 = vunpack.c.h.b16 %v252
    %v931 = vunpack.c.l.b16 %v253
    %v932 = vunpack.c.h.b16 %v253
    %v933 = vunpack.c.l.b16 %v254
    %v934 = vunpack.c.h.b16 %v254
    %v935 = vunpack.c.l.b16 %v255
    %v936 = vunpack.c.h.b16 %v255
    %v937 = vunpack.c.l.b16 %v256
    %v938 = vunpack.c.h.b16 %v256
    %v939 = vunpack.c.l.b16 %v257
    %v940 = vunpack.c.h.b16 %v257
    %v941 = vunpack.c.l.b16 %v258
    %v942 = vunpack.c.h.b16 %v258
    %v943 = vunpack.c.l.b16 %v259
    %v944 = vunpack.c.h.b16 %v259
    %v945 = vunpack.c.l.b16 %v260
    %v946 = vunpack.c.h.b16 %v260
    %v947 = vunpack.c.l.b16 %v261
    %v948 = vunpack.c.h.b16 %v261
    %v949 = vunpack.c.l.b16 %v262
    %v950 = vunpack.c.h.b16 %v262
    %v951 = vunpack.c.l.b16 %v263
    %v952 = vunpack.c.h.b16 %v263
    %v953 = vunpack.c.l.b16 %v264
    %v954 = vunpack.c.h.b16 %v264
    %v955 = vunpack.c.l.b16 %v265
    %v956 = vunpack.c.h.b16 %v265
    %v957 = vunpack.c.l.b16 %v266
    %v958 = vunpack.c.h.b16 %v266
    %v959 = vunpack.c.l.b16 %v267
    %v960 = vunpack.c.h.b16 %v267
    %v961 = vunpack.c.l.b16 %v268
    %v962 = vunpack.c.h.b16 %v268
    %v963 = vunpack.c.l.b16 %v269
    %v964 = vunpack.c.h.b16 %v269
    %v965 = vunpack.c.l.b16 %v270
    %v966 = vunpack.c.h.b16 %v270
    %v967 = vunpack.c.l.b16 %v271
    %v968 = vunpack.c.h.b16 %v271
    %v969 = vunpack.c.l.b16 %v272
    %v970 = vunpack.c.h.b16 %v272
    %v971 = vunpack.c.l.b16 %v273
    %v972 = vunpack.c.h.b16 %v273
    %v973 = vunpack.c.l.b16 %v274
    %v974 = vunpack.c.h.b16 %v274
    %v975 = vunpack.c.l.b16 %v275
    %v976 = vunpack.c.h.b16 %v275
    %v977 = vunpack.c.l.b16 %v276
    %v978 = vunpack.c.h.b16 %v276
    %v979 = vunpack.c.l.b16 %v277
    %v980 = vunpack.c.h.b16 %v277
    %v981 = vunpack.c.l.b16 %v278
    %v982 = vunpack.c.h.b16 %v278
    %v983 = vunpack.c.l.b16 %v279
    %v984 = vunpack.c.h.b16 %v279
    %v985 = vunpack.c.l.b16 %v280
    %v986 = vunpack.c.h.b16 %v280
    %v987 = vunpack.c.l.b16 %v281
    %v988 = vunpack.c.h.b16 %v281
    %v989 = vunpack.c.l.b16 %v282
    %v990 = vunpack.c.h.b16 %v282
    %v991 = vunpack.c.l.b16 %v283
    %v992 = vunpack.c.h.b16 %v283
    %v993 = vunpack.c.l.b16 %v284
    %v994 = vunpack.c.h.b16 %v284
    %v995 = vunpack.c.l.b16 %v285
    %v996 = vunpack.c.h.b16 %v285
    %v997 = vunpack.c.l.b16 %v286
    %v998 = vunpack.c.h.b16 %v286
    %v999 = vunpack.c.l.b16 %v287
    %v1000 = vunpack.c.h.b16 %v287
    %v1001 = vunpack.c.l.b16 %v288
    %v1002 = vunpack.c.h.b16 %v288
    %v1003 = vunpack.c.l.b16 %v289
    %v1004 = vunpack.c.h.b16 %v289
    %v1005 = vunpack.c.l.b16 %v290
    %v1006 = vunpack.c.h.b16 %v290
    %v1007 = vunpack.c.l.b16 %v291
    %v1008 = vunpack.c.h.b16 %v291
    %v1009 = vunpack.c.l.b16 %v292
    %v1010 = vunpack.c.h.b16 %v292
    %v1011 = vunpack.c.l.b16 %v293
    %v1012 = vunpack.c.h.b16 %v293
    %v1013 = vunpack.c.l.b16 %v294
    %v1014 = vunpack.c.h.b16 %v294
    %v1015 = vunpack.c.l.b16 %v295
    %v1016 = vunpack.c.h.b16 %v295
    %v1017 = vunpack.c.l.b16 %v296
    %v1018 = vunpack.c.h.b16 %v296
    %v1019 = vunpack.c.l.b16 %v297
    %v1020 = vunpack.c.h.b16 %v297
    %v1021 = vunpack.c.l.b16 %v298
    %v1022 = vunpack.c.h.b16 %v298
    %v1023 = vunpack.c.l.b16 %v299
    %v1024 = vunpack.c.h.b16 %v299
    %v1025 = vunpack.c.l.b16 %v300
    %v1026 = vunpack.c.h.b16 %v300
    %v1027 = vunpack.c.l.b16 %v301
    %v1028 = vunpack.c.h.b16 %v301
    %v1029 = vunpack.c.l.b16 %v302
    %v1030 = vunpack.c.h.b16 %v302
    %v1031 = vunpack.c.l.b16 %v303
    %v1032 = vunpack.c.h.b16 %v303
    %v1033 = vunpack.c.l.b16 %v304
    %v1034 = vunpack.c.h.b16 %v304
    %v1035 = vunpack.c.l.b16 %v305
    %v1036 = vunpack.c.h.b16 %v305
    %v1037 = vunpack.c.l.b16 %v306
    %v1038 = vunpack.c.h.b16 %v306
    %v1039 = vunpack.c.l.b16 %v307
    %v1040 = vunpack.c.h.b16 %v307
    %v1041 = vunpack.c.l.b16 %v308
    %v1042 = vunpack.c.h.b16 %v308
    %v1043 = vunpack.c.l.b16 %v309
    %v1044 = vunpack.c.h.b16 %v309
    %v1045 = vunpack.c.l.b16 %v310
    %v1046 = vunpack.c.h.b16 %v310
    %v1047 = vunpack.c.l.b16 %v311
    %v1048 = vunpack.c.h.b16 %v311
    %v1049 = vunpack.c.l.b16 %v312
    %v1050 = vunpack.c.h.b16 %v312
    %v1051 = vunpack.c.l.b16 %v313
    %v1052 = vunpack.c.h.b16 %v313
    %v1053 = vunpack.c.l.b16 %v314
    %v1054 = vunpack.c.h.b16 %v314
    %v1055 = vunpack.c.l.b16 %v315
    %v1056 = vunpack.c.h.b16 %v315
    %v1057 = vunpack.c.l.b16 %v316
    %v1058 = vunpack.c.h.b16 %v316
    %v1059 = vunpack.c.l.b16 %v317
    %v1060 = vunpack.c.h.b16 %v317
    %v1061 = vunpack.c.l.b16 %v318
    %v1062 = vunpack.c.h.b16 %v318
    %v1063 = vunpack.c.l.b16 %v319
    %v1064 = vunpack.c.h.b16 %v319
    %v1065 = vunpack.c.l.b16 %v320
    %v1066 = vunpack.c.h.b16 %v320
    %v1067 = vunpack.c.l.b16 %v321
    %v1068 = vunpack.c.h.b16 %v321
    %v1069 = vunpack.c.l.b16 %v322
    %v1070 = vunpack.c.h.b16 %v322
    %v1071 = vunpack.c.l.b16 %v323
    %v1072 = vunpack.c.h.b16 %v323
    %v1073 = vunpack.c.l.b16 %v324
    %v1074 = vunpack.c.h.b16 %v324
    %v1075 = vunpack.c.l.b16 %v325
    %v1076 = vunpack.c.h.b16 %v325
    %v1077 = vunpack.c.l.b16 %v326
    %v1078 = vunpack.c.h.b16 %v326
    %v1079 = vunpack.c.l.b16 %v327
    %v1080 = vunpack.c.h.b16 %v327
    %v1081 = vunpack.c.l.b16 %v328
    %v1082 = vunpack.c.h.b16 %v328
    %v1083 = vunpack.c.l.b16 %v329
    %v1084 = vunpack.c.h.b16 %v329
    %v1085 = vunpack.c.l.b16 %v330
    %v1086 = vunpack.c.h.b16 %v330
    %v1087 = vunpack.c.l.b16 %v331
    %v1088 = vunpack.c.h.b16 %v331
    %v1089 = vunpack.c.l.b16 %v332
    %v1090 = vunpack.c.h.b16 %v332
    %v1091 = vunpack.c.l.b16 %v333
    %v1092 = vunpack.c.h.b16 %v333
    %v1093 = vunpack.c.l.b16 %v334
    %v1094 = vunpack.c.h.b16 %v334
    %v1095 = vunpack.c.l.b16 %v335
    %v1096 = vunpack.c.h.b16 %v335
    %v1097 = vunpack.c.l.b16 %v336
    %v1098 = vunpack.c.h.b16 %v336
    %v1099 = vunpack.c.l.b16 %v337
    %v1100 = vunpack.c.h.b16 %v337
    %v1101 = vunpack.c.l.b16 %v338
    %v1102 = vunpack.c.h.b16 %v338
    %v1103 = vunpack.c.l.b16 %v339
    %v1104 = vunpack.c.h.b16 %v339
    %v1105 = vunpack.c.l.b16 %v340
    %v1106 = vunpack.c.h.b16 %v340
    %v1107 = vunpack.c.l.b16 %v341
    %v1108 = vunpack.c.h.b16 %v341
    %v1109 = vunpack.c.l.b16 %v342
    %v1110 = vunpack.c.h.b16 %v342
    %v1111 = vunpack.c.l.b16 %v343
    %v1112 = vunpack.c.h.b16 %v343
    %v1113 = vunpack.c.l.b16 %v344
    %v1114 = vunpack.c.h.b16 %v344
    %v1115 = vunpack.c.l.b16 %v345
    %v1116 = vunpack.c.h.b16 %v345
    %v1117 = vpack.c.b16 %v613, %v611
    %v1118 = vpack.c.b16 %v614, %v612
    %v1119 = vpack.c.b16 %v617, %v615
    %v1120 = vpack.c.b16 %v618, %v616
    %v1121 = vpack.c.b16 %v621, %v619
    %v1122 = vpack.c.b16 %v622, %v620
    %v1123 = vpack.c.b16 %v625, %v623
    %v1124 = vpack.c.b16 %v626, %v624
    %v1125 = vpack.c.b16 %v629, %v627
    %v1126 = vpack.c.b16 %v630, %v628
    %v1127 = vpack.c.b16 %v633, %v631
    %v1128 = vpack.c.b16 %v634, %v632
    %v1129 = vpack.c.b16 %v637, %v635
    %v1130 = vpack.c.b16 %v638, %v636
    %v1131 = vpack.c.b16 %v641, %v639
    %v1132 = vpack.c.b16 %v642, %v640
    %v1133 = vpack.c.b16 %v645, %v643
    %v1134 = vpack.c.b16 %v646, %v644
    %v1135 = vpack.c.b16 %v649, %v647
    %v1136 = vpack.c.b16 %v650, %v648
    %v1137 = vpack.c.b16 %v653, %v651
    %v1138 = vpack.c.b16 %v654, %v652
    %v1139 = vpack.c.b16 %v657, %v655
    %v1140 = vpack.c.b16 %v658, %v656
    %v1141 = vpack.c.b16 %v661, %v659
    %v1142 = vpack.c.b16 %v662, %v660
    %v1143 = vpack.c.b16 %v665, %v663
    %v1144 = vpack.c.b16 %v666, %v664
    %v1145 = vpack.c.b16 %v669, %v667
    %v1146 = vpack.c.b16 %v670, %v668
    %v1147 = vpack.c.b16 %v673, %v671
    %v1148 = vpack.c.b16 %v674, %v672
    %v1149 = vpack.c.b16 %v677, %v675
    %v1150 = vpack.c.b16 %v678, %v676
    %v1151 = vpack.c.b16 %v681, %v679
    %v1152 = vpack.c.b16 %v682, %v680
    %v1153 = vpack.c.b16 %v685, %v683
    %v1154 = vpack.c.b16 %v686, %v684
    %v1155 = vpack.c.b16 %v689, %v687
    %v1156 = vpack.c.b16 %v690, %v688
    %v1157 = vpack.c.b16 %v693, %v691
    %v1158 = vpack.c.b16 %v694, %v692
    %v1159 = vpack.c.b16 %v697, %v695
    %v1160 = vpack.c.b16 %v698, %v696
    %v1161 = vpack.c.b16 %v701, %v699
    %v1162 = vpack.c.b16 %v702, %v700
    %v1163 = vpack.c.b16 %v705, %v703
    %v1164 = vpack.c.b16 %v706, %v704
    %v1165 = vpack.c.b16 %v709, %v707
    %v1166 = vpack.c.b16 %v710, %v708
    %v1167 = vpack.c.b16 %v713, %v711
    %v1168 = vpack.c.b16 %v714, %v712
    %v1169 = vpack.c.b16 %v717, %v715
    %v1170 = vpack.c.b16 %v718, %v716
    %v1171 = vpack.c.b16 %v721, %v719
    %v1172 = vpack.c.b16 %v722, %v720
    %v1173 = vpack.c.b16 %v725, %v723
    %v1174 = vpack.c.b16 %v726, %v724
    %v1175 = vpack.c.b16 %v729, %v727
    %v1176 = vpack.c.b16 %v730, %v728
    %v1177 = vpack.c.b16 %v733, %v731
    %v1178 = vpack.c.b16 %v734, %v732
    %v1179 = vpack.c.b16 %v737, %v735
    %v1180 = vpack.c.b16 %v738, %v736
    %v1181 = vpack.c.b16 %v741, %v739
    %v1182 = vpack.c.b16 %v742, %v740
    %v1183 = vpack.c.b16 %v745, %v743
    %v1184 = vpack.c.b16 %v746, %v744
    %v1185 = vpack.c.b16 %v749, %v747
    %v1186 = vpack.c.b16 %v750, %v748
    %v1187 = vpack.c.b16 %v753, %v751
    %v1188 = vpack.c.b16 %v754, %v752
    %v1189 = vpack.c.b16 %v757, %v755
    %v1190 = vpack.c.b16 %v758, %v756
    %v1191 = vpack.c.b16 %v761, %v759
    %v1192 = vpack.c.b16 %v762, %v760
    %v1193 = vpack.c.b16 %v765, %v763
    %v1194 = vpack.c.b16 %v766, %v764
    %v1195 = vpack.c.b16 %v769, %v767
    %v1196 = vpack.c.b16 %v770, %v768
    %v1197 = vpack.c.b16 %v773, %v771
    %v1198 = vpack.c.b16 %v774, %v772
    %v1199 = vpack.c.b16 %v777, %v775
    %v1200 = vpack.c.b16 %v778, %v776
    %v1201 = vpack.c.b16 %v781, %v779
    %v1202 = vpack.c.b16 %v782, %v780
    %v1203 = vpack.c.b16 %v785, %v783
    %v1204 = vpack.c.b16 %v786, %v784
    %v1205 = vpack.c.b16 %v789, %v787
    %v1206 = vpack.c.b16 %v790, %v788
    %v1207 = vpack.c.b16 %v793, %v791
    %v1208 = vpack.c.b16 %v794, %v792
    %v1209 = vpack.c.b16 %v797, %v795
    %v1210 = vpack.c.b16 %v798, %v796
    %v1211 = vpack.c.b16 %v801, %v799
    %v1212 = vpack.c.b16 %v802, %v800
    %v1213 = vpack.c.b16 %v805, %v803
    %v1214 = vpack.c.b16 %v806, %v804
    %v1215 = vpack.c.b16 %v809, %v807
    %v1216 = vpack.c.b16 %v810, %v808
    %v1217 = vpack.c.b16 %v813, %v811
    %v1218 = vpack.c.b16 %v814, %v812
    %v1219 = vpack.c.b16 %v817, %v815
    %v1220 = vpack.c.b16 %v818, %v816
    %v1221 = vpack.c.b16 %v821, %v819
    %v1222 = vpack.c.b16 %v822, %v820
    %v1223 = vpack.c.b16 %v825, %v823
    %v1224 = vpack.c.b16 %v826, %v824
    %v1225 = vpack.c.b16 %v829, %v827
    %v1226 = vpack.c.b16 %v830, %v828
    %v1227 = vpack.c.b16 %v833, %v831
    %v1228 = vpack.c.b16 %v834, %v832
    %v1229 = vpack.c.b16 %v837, %v835
    %v1230 = vpack.c.b16 %v838, %v836
    %v1231 = vpack.c.b16 %v841, %v839
    %v1232 = vpack.c.b16 %v842, %v840
    %v1233 = vpack.c.b16 %v845, %v843
    %v1234 = vpack.c.b16 %v846, %v844
    %v1235 = vpack.c.b16 %v849, %v847
    %v1236 = vpack.c.b16 %v850, %v848
    %v1237 = vpack.c.b16 %v853, %v851
    %v1238 = vpack.c.b16 %v854, %v852
    %v1239 = vpack.c.b16 %v857, %v855
    %v1240 = vpack.c.b16 %v858, %v856
    %v1241 = vpack.c.b16 %v861, %v859
    %v1242 = vpack.c.b16 %v862, %v860
    %v1243 = vpack.c.b16 %v865, %v863
    %v1244 = vpack.c.b16 %v866, %v864
    %v1245 = vpack.c.b16 %v869, %v867
    %v1246 = vpack.c.b16 %v870, %v868
    %v1247 = vpack.c.b16 %v873, %v871
    %v1248 = vpack.c.b16 %v874, %v872
    %v1249 = vpack.c.b16 %v877, %v875
    %v1250 = vpack.c.b16 %v878, %v876
    %v1251 = vpack.c.b16 %v881, %v879
    %v1252 = vpack.c.b16 %v882, %v880
    %v1253 = vpack.c.b16 %v885, %v883
    %v1254 = vpack.c.b16 %v886, %v884
    %v1255 = vpack.c.b16 %v889, %v887
    %v1256 = vpack.c.b16 %v890, %v888
    %v1257 = vpack.c.b16 %v893, %v891
    %v1258 = vpack.c.b16 %v894, %v892
    %v1259 = vpack.c.b16 %v897, %v895
    %v1260 = vpack.c.b16 %v898, %v896
    %v1261 = vpack.c.b16 %v901, %v899
    %v1262 = vpack.c.b16 %v902, %v900
    %v1263 = vpack.c.b16 %v905, %v903
    %v1264 = vpack.c.b16 %v906, %v904
    %v1265 = vpack.c.b16 %v909, %v907
    %v1266 = vpack.c.b16 %v910, %v908
    %v1267 = vpack.c.b16 %v913, %v911
    %v1268 = vpack.c.b16 %v914, %v912
    %v1269 = vpack.c.b16 %v917, %v915
    %v1270 = vpack.c.b16 %v918, %v916
    %v1271 = vpack.c.b16 %v921, %v919
    %v1272 = vpack.c.b16 %v922, %v920
    %v1273 = vpack.c.b16 %v925, %v923
    %v1274 = vpack.c.b16 %v926, %v924
    %v1275 = vpack.c.b16 %v929, %v927
    %v1276 = vpack.c.b16 %v930, %v928
    %v1277 = vpack.c.b16 %v933, %v931
    %v1278 = vpack.c.b16 %v934, %v932
    %v1279 = vpack.c.b16 %v937, %v935
    %v1280 = vpack.c.b16 %v938, %v936
    %v1281 = vpack.c.b16 %v941, %v939
    %v1282 = vpack.c.b16 %v942, %v940
    %v1283 = vpack.c.b16 %v945, %v943
    %v1284 = vpack.c.b16 %v946, %v944
    %v1285 = vpack.c.b16 %v949, %v947
    %v1286 = vpack.c.b16 %v950, %v948
    %v1287 = vpack.c.b16 %v953, %v951
    %v1288 = vpack.c.b16 %v954, %v952
    %v1289 = vpack.c.b16 %v957, %v955
    %v1290 = vpack.c.b16 %v958, %v956
    %v1291 = vpack.c.b16 %v961, %v959
    %v1292 = vpack.c.b16 %v962, %v960
    %v1293 = vpack.c.b16 %v965, %v963
    %v1294 = vpack.c.b16 %v966, %v964
    %v1295 = vpack.c.b16 %v969, %v967
    %v1296 = vpack.c.b16 %v970, %v968
    %v1297 = vpack.c.b16 %v973, %v971
    %v1298 = vpack.c.b16 %v974, %v972
    %v1299 = vpack.c.b16 %v977, %v975
    %v1300 = vpack.c.b16 %v978, %v976
    %v1301 = vpack.c.b16 %v981, %v979
    %v1302 = vpack.c.b16 %v982, %v980
    %v1303 = vpack.c.b16 %v985, %v983
    %v1304 = vpack.c.b16 %v986, %v984
    %v1305 = vpack.c.b16 %v989, %v987
    %v1306 = vpack.c.b16 %v990, %v988
    %v1307 = vpack.c.b16 %v993, %v991
    %v1308 = vpack.c.b16 %v994, %v992
    %v1309 = vpack.c.b16 %v997, %v995
    %v1310 = vpack.c.b16 %v998, %v996
    %v1311 = vpack.c.b16 %v1001, %v999
    %v1312 = vpack.c.b16 %v1002, %v1000
    %v1313 = vpack.c.b16 %v1005, %v1003
    %v1314 = vpack.c.b16 %v1006, %v1004
    %v1315 = vpack.c.b16 %v1009, %v1007
    %v1316 = vpack.c.b16 %v1010, %v1008
    %v1317 = vpack.c.b16 %v1013, %v1011
    %v1318 = vpack.c.b16 %v1014, %v1012
    %v1319 = vpack.c.b16 %v1017, %v1015
    %v1320 = vpack.c.b16 %v1018, %v1016
    %v1321 = vpack.c.b16 %v1021, %v1019
    %v1322 = vpack.c.b16 %v1022, %v1020
    %v1323 = vpack.c.b16 %v1025, %v1023
    %v1324 = vpack.c.b16 %v1026, %v1024
    %v1325 = vpack.c.b16 %v1029, %v1027
    %v1326 = vpack.c.b16 %v1030, %v1028
    %v1327 = vpack.c.b16 %v1033, %v1031
    %v1328 = vpack.c.b16 %v1034, %v1032
    %v1329 = vpack.c.b16 %v1037, %v1035
    %v1330 = vpack.c.b16 %v1038, %v1036
    %v1331 = vpack.c.b16 %v1041, %v1039
    %v1332 = vpack.c.b16 %v1042, %v1040
    %v1333 = vpack.c.b16 %v1045, %v1043
    %v1334 = vpack.c.b16 %v1046, %v1044
    %v1335 = vpack.c.b16 %v1049, %v1047
    %v1336 = vpack.c.b16 %v1050, %v1048
    %v1337 = vpack.c.b16 %v1053, %v1051
    %v1338 = vpack.c.b16 %v1054, %v1052
    %v1339 = vpack.c.b16 %v1057, %v1055
    %v1340 = vpack.c.b16 %v1058, %v1056
    %v1341 = vpack.c.b16 %v1061, %v1059
    %v1342 = vpack.c.b16 %v1062, %v1060
    %v1343 = vpack.c.b16 %v1065, %v1063
    %v1344 = vpack.c.b16 %v1066, %v1064
    %v1345 = vpack.c.b16 %v1069, %v1067
    %v1346 = vpack.c.b16 %v1070, %v1068
    %v1347 = vpack.c.b16 %v1073, %v1071
    %v1348 = vpack.c.b16 %v1074, %v1072
    %v1349 = vpack.c.b16 %v1077, %v1075
    %v1350 = vpack.c.b16 %v1078, %v1076
    %v1351 = vpack.c.b16 %v1081, %v1079
    %v1352 = vpack.c.b16 %v1082, %v1080
    %v1353 = vpack.c.b16 %v1085, %v1083
    %v1354 = vpack.c.b16 %v1086, %v1084
    %v1355 = vpack.c.b16 %v1089, %v1087
    %v1356 = vpack.c.b16 %v1090, %v1088
    %v1357 = vpack.c.b16 %v1093, %v1091
    %v1358 = vpack.c.b16 %v1094, %v1092
    %v1359 = vpack.c.b16 %v1097, %v1095
    %v1360 = vpack.c.b16 %v1098, %v1096
    %v1361 = vpack.c.b16 %v1101, %v1099
    %v1362 = vpack.c.b16 %v1102, %v1100
    %v1363 = vpack.c.b16 %v1105, %v1103
    %v1364 = vpack.c.b16 %v1106, %v1104
    %v1365 = vpack.c.b16 %v1109, %v1107
    %v1366 = vpack.c.b16 %v1110, %v1108
    %v1367 = vpack.c.b16 %v1113, %v1111
    %v1368 = vpack.c.b16 %v1114, %v1112
    %v1369 = vpack.c.b16 %v1115, %v1115
    %v1370 = vpack.c.b16 %v1116, %v1116
    %vm1623 = vcmask 809984
    %v1625 = vsel %vm1623, %v92, 0
    %vm1627 = vcmask 1040384
    %vm1628 = vcmask 1041408
    %v1629 = vsel %vm1627, 4294967295, 65535
    %v1630 = vsel %vm1628, %v1629, 0
    %v1632 = vand.u32 %v1369, %v1630
    %v1635 = vand.u32 %v1370, %v1630
    %1637 = vmatprep.subr.bf16.mxu0 %v1118
    %1638 = vmatpush1.bf16.msra.mxu0 %v1117
    %1639 = vmatprep.subr.bf16.mxu0 %v1120
    %1640 = vmatpush1.bf16.msra.mxu0 %v1119
    %1641 = vmatprep.subr.bf16.mxu0 %v1122
    %1642 = vmatpush1.bf16.msra.mxu0 %v1121
    %1643 = vmatprep.subr.bf16.mxu0 %v1124
    %1644 = vmatpush1.bf16.msra.mxu0 %v1123
    %1645 = vmatprep.subr.bf16.mxu0 %v1126
    %1646 = vmatpush1.bf16.msra.mxu0 %v1125
    %1647 = vmatprep.subr.bf16.mxu0 %v1128
    %1648 = vmatpush1.bf16.msra.mxu0 %v1127
    %1649 = vmatprep.subr.bf16.mxu0 %v1130
    %1650 = vmatpush1.bf16.msra.mxu0 %v1129
    %1651 = vmatprep.subr.bf16.mxu0 %v1132
    %1652 = vmatpush1.bf16.msra.mxu0 %v1131
    %1653 = vmatprep.subr.bf16.mxu0 %v1134
    %1654 = vmatpush1.bf16.msra.mxu0 %v1133
    %1655 = vmatprep.subr.bf16.mxu0 %v1136
    %1656 = vmatpush1.bf16.msra.mxu0 %v1135
    %1657 = vmatprep.subr.bf16.mxu0 %v1138
    %1658 = vmatpush1.bf16.msra.mxu0 %v1137
    %1659 = vmatprep.subr.bf16.mxu0 %v1140
    %1660 = vmatpush1.bf16.msra.mxu0 %v1139
    %1661 = vmatprep.subr.bf16.mxu0 %v1142
    %1662 = vmatpush1.bf16.msra.mxu0 %v1141
    %1663 = vmatprep.subr.bf16.mxu0 %v1144
    %1664 = vmatpush1.bf16.msra.mxu0 %v1143
    %1665 = vmatprep.subr.bf16.mxu0 %v1146
    %1666 = vmatpush1.bf16.msra.mxu0 %v1145
    %1667 = vmatprep.subr.bf16.mxu0 %v1148
    %1668 = vmatpush1.bf16.msra.mxu0 %v1147
    %1669 = vmatprep.mubr.bf16.mxu0 %v78
    %1670 = vmatmul.mubr.bf16.gmra.mrb[0].mxu0 %v77
    %v1671 = vpop.f32.mrb[0].mxu0
    %v1672 = vadd.f32 %v351, %v1671
    %v1673 = vpop.f32.mrb[0].mxu0
    %v1674 = vadd.f32 %v355, %v1673
    %v1675 = vpop.f32.mrb[0].mxu0
    %v1676 = vpop.f32.mrb[0].mxu0
    %1677 = vdwg.mxu0
    %1678 = vmatprep.subr.bf16.mxu0 %v1150
    %1679 = vmatpush1.bf16.msra.mxu0 %v1149
    %1680 = vmatprep.subr.bf16.mxu0 %v1152
    %1681 = vmatpush1.bf16.msra.mxu0 %v1151
    %1682 = vmatprep.subr.bf16.mxu0 %v1154
    %1683 = vmatpush1.bf16.msra.mxu0 %v1153
    %1684 = vmatprep.subr.bf16.mxu0 %v1156
    %1685 = vmatpush1.bf16.msra.mxu0 %v1155
    %1686 = vmatprep.subr.bf16.mxu0 %v1158
    %1687 = vmatpush1.bf16.msra.mxu0 %v1157
    %1688 = vmatprep.subr.bf16.mxu0 %v1160
    %1689 = vmatpush1.bf16.msra.mxu0 %v1159
    %1690 = vmatprep.subr.bf16.mxu0 %v1162
    %1691 = vmatpush1.bf16.msra.mxu0 %v1161
    %1692 = vmatprep.subr.bf16.mxu0 %v1164
    %1693 = vmatpush1.bf16.msra.mxu0 %v1163
    %1694 = vmatprep.subr.bf16.mxu0 %v1166
    %1695 = vmatpush1.bf16.msra.mxu0 %v1165
    %1696 = vmatprep.subr.bf16.mxu0 %v1168
    %1697 = vmatpush1.bf16.msra.mxu0 %v1167
    %1698 = vmatprep.subr.bf16.mxu0 %v1170
    %1699 = vmatpush1.bf16.msra.mxu0 %v1169
    %1700 = vmatprep.subr.bf16.mxu0 %v1172
    %1701 = vmatpush1.bf16.msra.mxu0 %v1171
    %1702 = vmatprep.subr.bf16.mxu0 %v1174
    %1703 = vmatpush1.bf16.msra.mxu0 %v1173
    %1704 = vmatprep.subr.bf16.mxu0 %v1176
    %1705 = vmatpush1.bf16.msra.mxu0 %v1175
    %1706 = vmatprep.subr.bf16.mxu0 %v1178
    %1707 = vmatpush1.bf16.msra.mxu0 %v1177
    %1708 = vmatprep.subr.bf16.mxu0 %v1180
    %1709 = vmatpush1.bf16.msra.mxu0 %v1179
    %1710 = vmatprep.mubr.bf16.mxu0 %v80
    %1711 = vmatmul.mubr.bf16.gmra.mrb[0].mxu0 %v79
    %v1712 = vpop.f32.mrb[0].mxu0
    %v1713 = vadd.f32 %v1672, %v1712
    %v1714 = vpop.f32.mrb[0].mxu0
    %v1715 = vadd.f32 %v1674, %v1714
    %v1716 = vpop.f32.mrb[0].mxu0
    %v1717 = vpop.f32.mrb[0].mxu0
    %1718 = vdwg.mxu0
    %1719 = vmatprep.subr.bf16.mxu0 %v1182
    %1720 = vmatpush1.bf16.msra.mxu0 %v1181
    %1721 = vmatprep.subr.bf16.mxu0 %v1184
    %1722 = vmatpush1.bf16.msra.mxu0 %v1183
    %1723 = vmatprep.subr.bf16.mxu0 %v1186
    %1724 = vmatpush1.bf16.msra.mxu0 %v1185
    %1725 = vmatprep.subr.bf16.mxu0 %v1188
    %1726 = vmatpush1.bf16.msra.mxu0 %v1187
    %1727 = vmatprep.subr.bf16.mxu0 %v1190
    %1728 = vmatpush1.bf16.msra.mxu0 %v1189
    %1729 = vmatprep.subr.bf16.mxu0 %v1192
    %1730 = vmatpush1.bf16.msra.mxu0 %v1191
    %1731 = vmatprep.subr.bf16.mxu0 %v1194
    %1732 = vmatpush1.bf16.msra.mxu0 %v1193
    %1733 = vmatprep.subr.bf16.mxu0 %v1196
    %1734 = vmatpush1.bf16.msra.mxu0 %v1195
    %1735 = vmatprep.subr.bf16.mxu0 %v1198
    %1736 = vmatpush1.bf16.msra.mxu0 %v1197
    %1737 = vmatprep.subr.bf16.mxu0 %v1200
    %1738 = vmatpush1.bf16.msra.mxu0 %v1199
    %1739 = vmatprep.subr.bf16.mxu0 %v1202
    %1740 = vmatpush1.bf16.msra.mxu0 %v1201
    %1741 = vmatprep.subr.bf16.mxu0 %v1204
    %1742 = vmatpush1.bf16.msra.mxu0 %v1203
    %1743 = vmatprep.subr.bf16.mxu0 %v1206
    %1744 = vmatpush1.bf16.msra.mxu0 %v1205
    %1745 = vmatprep.subr.bf16.mxu0 %v1208
    %1746 = vmatpush1.bf16.msra.mxu0 %v1207
    %1747 = vmatprep.subr.bf16.mxu0 %v1210
    %1748 = vmatpush1.bf16.msra.mxu0 %v1209
    %1749 = vmatprep.subr.bf16.mxu0 %v1212
    %1750 = vmatpush1.bf16.msra.mxu0 %v1211
    %1751 = vmatprep.mubr.bf16.mxu0 %v82
    %1752 = vmatmul.mubr.bf16.gmra.mrb[0].mxu0 %v81
    %v1753 = vpop.f32.mrb[0].mxu0
    %v1754 = vadd.f32 %v1713, %v1753
    %v1755 = vpop.f32.mrb[0].mxu0
    %v1756 = vadd.f32 %v1715, %v1755
    %v1757 = vpop.f32.mrb[0].mxu0
    %v1758 = vpop.f32.mrb[0].mxu0
    %1759 = vdwg.mxu0
    %1760 = vmatprep.subr.bf16.mxu0 %v1214
    %1761 = vmatpush1.bf16.msra.mxu0 %v1213
    %1762 = vmatprep.subr.bf16.mxu0 %v1216
    %1763 = vmatpush1.bf16.msra.mxu0 %v1215
    %1764 = vmatprep.subr.bf16.mxu0 %v1218
    %1765 = vmatpush1.bf16.msra.mxu0 %v1217
    %1766 = vmatprep.subr.bf16.mxu0 %v1220
    %1767 = vmatpush1.bf16.msra.mxu0 %v1219
    %1768 = vmatprep.subr.bf16.mxu0 %v1222
    %1769 = vmatpush1.bf16.msra.mxu0 %v1221
    %1770 = vmatprep.subr.bf16.mxu0 %v1224
    %1771 = vmatpush1.bf16.msra.mxu0 %v1223
    %1772 = vmatprep.subr.bf16.mxu0 %v1226
    %1773 = vmatpush1.bf16.msra.mxu0 %v1225
    %1774 = vmatprep.subr.bf16.mxu0 %v1228
    %1775 = vmatpush1.bf16.msra.mxu0 %v1227
    %1776 = vmatprep.subr.bf16.mxu0 %v1230
    %1777 = vmatpush1.bf16.msra.mxu0 %v1229
    %1778 = vmatprep.subr.bf16.mxu0 %v1232
    %1779 = vmatpush1.bf16.msra.mxu0 %v1231
    %1780 = vmatprep.subr.bf16.mxu0 %v1234
    %1781 = vmatpush1.bf16.msra.mxu0 %v1233
    %1782 = vmatprep.subr.bf16.mxu0 %v1236
    %1783 = vmatpush1.bf16.msra.mxu0 %v1235
    %1784 = vmatprep.subr.bf16.mxu0 %v1238
    %1785 = vmatpush1.bf16.msra.mxu0 %v1237
    %1786 = vmatprep.subr.bf16.mxu0 %v1240
    %1787 = vmatpush1.bf16.msra.mxu0 %v1239
    %1788 = vmatprep.subr.bf16.mxu0 %v1242
    %1789 = vmatpush1.bf16.msra.mxu0 %v1241
    %1790 = vmatprep.subr.bf16.mxu0 %v1244
    %1791 = vmatpush1.bf16.msra.mxu0 %v1243
    %1792 = vmatprep.mubr.bf16.mxu0 %v84
    %1793 = vmatmul.mubr.bf16.gmra.mrb[0].mxu0 %v83
    %v1794 = vpop.f32.mrb[0].mxu0
    %v1795 = vadd.f32 %v1754, %v1794
    %v1796 = vpop.f32.mrb[0].mxu0
    %v1797 = vadd.f32 %v1756, %v1796
    %v1798 = vpop.f32.mrb[0].mxu0
    %v1799 = vpop.f32.mrb[0].mxu0
    %1800 = vdwg.mxu0
    %1801 = vmatprep.subr.bf16.mxu0 %v1246
    %1802 = vmatpush1.bf16.msra.mxu0 %v1245
    %1803 = vmatprep.subr.bf16.mxu0 %v1248
    %1804 = vmatpush1.bf16.msra.mxu0 %v1247
    %1805 = vmatprep.subr.bf16.mxu0 %v1250
    %1806 = vmatpush1.bf16.msra.mxu0 %v1249
    %1807 = vmatprep.subr.bf16.mxu0 %v1252
    %1808 = vmatpush1.bf16.msra.mxu0 %v1251
    %1809 = vmatprep.subr.bf16.mxu0 %v1254
    %1810 = vmatpush1.bf16.msra.mxu0 %v1253
    %1811 = vmatprep.subr.bf16.mxu0 %v1256
    %1812 = vmatpush1.bf16.msra.mxu0 %v1255
    %1813 = vmatprep.subr.bf16.mxu0 %v1258
    %1814 = vmatpush1.bf16.msra.mxu0 %v1257
    %1815 = vmatprep.subr.bf16.mxu0 %v1260
    %1816 = vmatpush1.bf16.msra.mxu0 %v1259
    %1817 = vmatprep.subr.bf16.mxu0 %v1262
    %1818 = vmatpush1.bf16.msra.mxu0 %v1261
    %1819 = vmatprep.subr.bf16.mxu0 %v1264
    %1820 = vmatpush1.bf16.msra.mxu0 %v1263
    %1821 = vmatprep.subr.bf16.mxu0 %v1266
    %1822 = vmatpush1.bf16.msra.mxu0 %v1265
    %1823 = vmatprep.subr.bf16.mxu0 %v1268
    %1824 = vmatpush1.bf16.msra.mxu0 %v1267
    %1825 = vmatprep.subr.bf16.mxu0 %v1270
    %1826 = vmatpush1.bf16.msra.mxu0 %v1269
    %1827 = vmatprep.subr.bf16.mxu0 %v1272
    %1828 = vmatpush1.bf16.msra.mxu0 %v1271
    %1829 = vmatprep.subr.bf16.mxu0 %v1274
    %1830 = vmatpush1.bf16.msra.mxu0 %v1273
    %1831 = vmatprep.subr.bf16.mxu0 %v1276
    %1832 = vmatpush1.bf16.msra.mxu0 %v1275
    %1833 = vmatprep.mubr.bf16.mxu0 %v86
    %1834 = vmatmul.mubr.bf16.gmra.mrb[0].mxu0 %v85
    %v1835 = vpop.f32.mrb[0].mxu0
    %v1836 = vadd.f32 %v1795, %v1835
    %v1837 = vpop.f32.mrb[0].mxu0
    %v1838 = vadd.f32 %v1797, %v1837
    %v1839 = vpop.f32.mrb[0].mxu0
    %v1840 = vpop.f32.mrb[0].mxu0
    %1841 = vdwg.mxu0
    %1842 = vmatprep.subr.bf16.mxu0 %v1278
    %1843 = vmatpush1.bf16.msra.mxu0 %v1277
    %1844 = vmatprep.subr.bf16.mxu0 %v1280
    %1845 = vmatpush1.bf16.msra.mxu0 %v1279
    %1846 = vmatprep.subr.bf16.mxu0 %v1282
    %1847 = vmatpush1.bf16.msra.mxu0 %v1281
    %1848 = vmatprep.subr.bf16.mxu0 %v1284
    %1849 = vmatpush1.bf16.msra.mxu0 %v1283
    %1850 = vmatprep.subr.bf16.mxu0 %v1286
    %1851 = vmatpush1.bf16.msra.mxu0 %v1285
    %1852 = vmatprep.subr.bf16.mxu0 %v1288
    %1853 = vmatpush1.bf16.msra.mxu0 %v1287
    %1854 = vmatprep.subr.bf16.mxu0 %v1290
    %1855 = vmatpush1.bf16.msra.mxu0 %v1289
    %1856 = vmatprep.subr.bf16.mxu0 %v1292
    %1857 = vmatpush1.bf16.msra.mxu0 %v1291
    %1858 = vmatprep.subr.bf16.mxu0 %v1294
    %1859 = vmatpush1.bf16.msra.mxu0 %v1293
    %1860 = vmatprep.subr.bf16.mxu0 %v1296
    %1861 = vmatpush1.bf16.msra.mxu0 %v1295
    %1862 = vmatprep.subr.bf16.mxu0 %v1298
    %1863 = vmatpush1.bf16.msra.mxu0 %v1297
    %1864 = vmatprep.subr.bf16.mxu0 %v1300
    %1865 = vmatpush1.bf16.msra.mxu0 %v1299
    %1866 = vmatprep.subr.bf16.mxu0 %v1302
    %1867 = vmatpush1.bf16.msra.mxu0 %v1301
    %1868 = vmatprep.subr.bf16.mxu0 %v1304
    %1869 = vmatpush1.bf16.msra.mxu0 %v1303
    %1870 = vmatprep.subr.bf16.mxu0 %v1306
    %1871 = vmatpush1.bf16.msra.mxu0 %v1305
    %1872 = vmatprep.subr.bf16.mxu0 %v1308
    %1873 = vmatpush1.bf16.msra.mxu0 %v1307
    %1874 = vmatprep.mubr.bf16.mxu0 %v88
    %1875 = vmatmul.mubr.bf16.gmra.mrb[0].mxu0 %v87
    %v1876 = vpop.f32.mrb[0].mxu0
    %v1877 = vadd.f32 %v1836, %v1876
    %v1878 = vpop.f32.mrb[0].mxu0
    %v1879 = vadd.f32 %v1838, %v1878
    %v1880 = vpop.f32.mrb[0].mxu0
    %v1881 = vpop.f32.mrb[0].mxu0
    %1882 = vdwg.mxu0
    %1883 = vmatprep.subr.bf16.mxu0 %v1310
    %1884 = vmatpush1.bf16.msra.mxu0 %v1309
    %1885 = vmatprep.subr.bf16.mxu0 %v1312
    %1886 = vmatpush1.bf16.msra.mxu0 %v1311
    %1887 = vmatprep.subr.bf16.mxu0 %v1314
    %1888 = vmatpush1.bf16.msra.mxu0 %v1313
    %1889 = vmatprep.subr.bf16.mxu0 %v1316
    %1890 = vmatpush1.bf16.msra.mxu0 %v1315
    %1891 = vmatprep.subr.bf16.mxu0 %v1318
    %1892 = vmatpush1.bf16.msra.mxu0 %v1317
    %1893 = vmatprep.subr.bf16.mxu0 %v1320
    %1894 = vmatpush1.bf16.msra.mxu0 %v1319
    %1895 = vmatprep.subr.bf16.mxu0 %v1322
    %1896 = vmatpush1.bf16.msra.mxu0 %v1321
    %1897 = vmatprep.subr.bf16.mxu0 %v1324
    %1898 = vmatpush1.bf16.msra.mxu0 %v1323
    %1899 = vmatprep.subr.bf16.mxu0 %v1326
    %1900 = vmatpush1.bf16.msra.mxu0 %v1325
    %1901 = vmatprep.subr.bf16.mxu0 %v1328
    %1902 = vmatpush1.bf16.msra.mxu0 %v1327
    %1903 = vmatprep.subr.bf16.mxu0 %v1330
    %1904 = vmatpush1.bf16.msra.mxu0 %v1329
    %1905 = vmatprep.subr.bf16.mxu0 %v1332
    %1906 = vmatpush1.bf16.msra.mxu0 %v1331
    %1907 = vmatprep.subr.bf16.mxu0 %v1334
    %1908 = vmatpush1.bf16.msra.mxu0 %v1333
    %1909 = vmatprep.subr.bf16.mxu0 %v1336
    %1910 = vmatpush1.bf16.msra.mxu0 %v1335
    %1911 = vmatprep.subr.bf16.mxu0 %v1338
    %1912 = vmatpush1.bf16.msra.mxu0 %v1337
    %1913 = vmatprep.subr.bf16.mxu0 %v1340
    %1914 = vmatpush1.bf16.msra.mxu0 %v1339
    %1915 = vmatprep.mubr.bf16.mxu0 %v90
    %1916 = vmatmul.mubr.bf16.gmra.mrb[0].mxu0 %v89
    %v1917 = vpop.f32.mrb[0].mxu0
    %v1918 = vadd.f32 %v1877, %v1917
    %v1919 = vpop.f32.mrb[0].mxu0
    %v1920 = vadd.f32 %v1879, %v1919
    %v1921 = vpop.f32.mrb[0].mxu0
    %v1922 = vpop.f32.mrb[0].mxu0
    %1923 = vdwg.mxu0
    %1924 = vmatprep.subr.bf16.mxu0 %v1342
    %1925 = vmatpush1.bf16.msra.mxu0 %v1341
    %1926 = vmatprep.subr.bf16.mxu0 %v1344
    %1927 = vmatpush1.bf16.msra.mxu0 %v1343
    %1928 = vmatprep.subr.bf16.mxu0 %v1346
    %1929 = vmatpush1.bf16.msra.mxu0 %v1345
    %1930 = vmatprep.subr.bf16.mxu0 %v1348
    %1931 = vmatpush1.bf16.msra.mxu0 %v1347
    %1932 = vmatprep.subr.bf16.mxu0 %v1350
    %1933 = vmatpush1.bf16.msra.mxu0 %v1349
    %1934 = vmatprep.subr.bf16.mxu0 %v1352
    %1935 = vmatpush1.bf16.msra.mxu0 %v1351
    %1936 = vmatprep.subr.bf16.mxu0 %v1354
    %1937 = vmatpush1.bf16.msra.mxu0 %v1353
    %1938 = vmatprep.subr.bf16.mxu0 %v1356
    %1939 = vmatpush1.bf16.msra.mxu0 %v1355
    %1940 = vmatprep.subr.bf16.mxu0 %v1358
    %1941 = vmatpush1.bf16.msra.mxu0 %v1357
    %1942 = vmatprep.subr.bf16.mxu0 %v1360
    %1943 = vmatpush1.bf16.msra.mxu0 %v1359
    %1944 = vmatprep.subr.bf16.mxu0 %v1362
    %1945 = vmatpush1.bf16.msra.mxu0 %v1361
    %1946 = vmatprep.subr.bf16.mxu0 %v1364
    %1947 = vmatpush1.bf16.msra.mxu0 %v1363
    %1948 = vmatprep.subr.bf16.mxu0 %v1366
    %1949 = vmatpush1.bf16.msra.mxu0 %v1365
    %1950 = vmatprep.subr.bf16.mxu0 %v1368
    %1951 = vmatpush1.bf16.msra.mxu0 %v1367
    %1952 = vmatprep.subr.bf16.mxu0 %v1635
    %1953 = vmatpush1.bf16.msra.mxu0 %v1632
    %1954 = vmatprep.subr.bf16.mxu0 0
    %1955 = vmatpush1.bf16.msra.mxu0 0
    %1956 = vmatprep.mubr.bf16.mxu0 %v1625
    %1957 = vmatmul.mubr.bf16.gmra.mrb[0].mxu0 %v91
    %v1958 = vpop.f32.mrb[0].mxu0
    %v1959 = vadd.f32 %v1918, %v1958
    %v1960 = vpop.f32.mrb[0].mxu0
    %v1961 = vadd.f32 %v1920, %v1960
    %v1962 = vpop.f32.mrb[0].mxu0
    %v1963 = vpop.f32.mrb[0].mxu0
    %1964 = vdwg.mxu0
    %v1965 = vmax.f32 %v1959, 0.0
    %v1966 = vmax.f32 %v1961, 0.0
    %v1967 = vpack.c.bf16 %v1965, %v1965
    %v1968 = vpack.c.bf16 %v1966, %v1966
    %v1969 = vld [vmem:[#allocation4] sm:$0xf]
    %v1970 = vld [vmem:[#allocation4 + $0x4] sm:$0xf]
    %v1971 = vld [vmem:[#allocation4 + $0x8] sm:$0xf]
    %v1972 = vld [vmem:[#allocation4 + $0xc] sm:$0xf]
    %v1973 = vld [vmem:[#allocation4 + $0x10] sm:$0xf]
    %v1974 = vld [vmem:[#allocation4 + $0x14] sm:$0xf]
    %v1975 = vld [vmem:[#allocation4 + $0x18] sm:$0xf]
    %v1976 = vld [vmem:[#allocation4 + $0x1c] sm:$0xf]
    %v1977 = vld [vmem:[#allocation4 + $0x20] sm:$0xf]
    %v1978 = vld [vmem:[#allocation4 + $0x24] sm:$0xf]
    %v1979 = vld [vmem:[#allocation4 + $0x28] sm:$0xf]
    %v1980 = vld [vmem:[#allocation4 + $0x2c] sm:$0xf]
    %v1981 = vld [vmem:[#allocation4 + $0x30] sm:$0xf]
    %v1982 = vld [vmem:[#allocation4 + $0x34] sm:$0xf]
    %v1983 = vld [vmem:[#allocation4 + $0x38] sm:$0xf]
    %v1984 = vld [vmem:[#allocation4 + $0x3c] sm:$0xf]
    %v1985 = vld [vmem:[#allocation4 + $0x40] sm:$0xf]
    %v1986 = vld [vmem:[#allocation4 + $0x44] sm:$0xf]
    %v1987 = vld [vmem:[#allocation4 + $0x48] sm:$0xf]
    %v1988 = vld [vmem:[#allocation4 + $0x4c] sm:$0xf]
    %v1989 = vld [vmem:[#allocation4 + $0x50] sm:$0xf]
    %v1990 = vld [vmem:[#allocation4 + $0x54] sm:$0xf]
    %v1991 = vld [vmem:[#allocation4 + $0x58] sm:$0xf]
    %v1992 = vld [vmem:[#allocation4 + $0x5c] sm:$0xf]
    %v1993 = vld [vmem:[#allocation4 + $0x60] sm:$0xf]
    %v1994 = vld [vmem:[#allocation4 + $0x64] sm:$0xf]
    %v1995 = vld [vmem:[#allocation4 + $0x68] sm:$0xf]
    %v1996 = vld [vmem:[#allocation4 + $0x6c] sm:$0xf]
    %v1997 = vld [vmem:[#allocation4 + $0x70] sm:$0xf]
    %v1998 = vld [vmem:[#allocation4 + $0x74] sm:$0xf]
    %v1999 = vld [vmem:[#allocation4 + $0x78] sm:$0xf]
    %v2000 = vld [vmem:[#allocation4 + $0x7c] sm:$0xf]
    %v2001 = vld [vmem:[%s4] sm:$0x1]
    %v2003 = vlaneseq
    %v2004 = vshrl.u32 %v2003, 7
    %v2005 = vsub.s32 0, %v2004
    %v2006 = vrot.slane %v2001, %v2005
    %v2040 = vunpack.c.l.b16 %v1969
    %v2041 = vunpack.c.l.b16 %v1970
    %v2042 = vunpack.c.l.b16 %v1971
    %v2043 = vunpack.c.l.b16 %v1972
    %v2044 = vunpack.c.l.b16 %v1973
    %v2045 = vunpack.c.l.b16 %v1974
    %v2046 = vunpack.c.l.b16 %v1975
    %v2047 = vunpack.c.l.b16 %v1976
    %v2048 = vunpack.c.l.b16 %v1977
    %v2049 = vunpack.c.l.b16 %v1978
    %v2050 = vunpack.c.l.b16 %v1979
    %v2051 = vunpack.c.l.b16 %v1980
    %v2052 = vunpack.c.l.b16 %v1981
    %v2053 = vunpack.c.l.b16 %v1982
    %v2054 = vunpack.c.l.b16 %v1983
    %v2055 = vunpack.c.l.b16 %v1984
    %v2056 = vunpack.c.l.b16 %v1985
    %v2057 = vunpack.c.l.b16 %v1986
    %v2058 = vunpack.c.l.b16 %v1987
    %v2059 = vunpack.c.l.b16 %v1988
    %v2060 = vunpack.c.l.b16 %v1989
    %v2061 = vunpack.c.l.b16 %v1990
    %v2062 = vunpack.c.l.b16 %v1991
    %v2063 = vunpack.c.l.b16 %v1992
    %v2064 = vunpack.c.l.b16 %v1993
    %v2065 = vunpack.c.l.b16 %v1994
    %v2066 = vunpack.c.l.b16 %v1995
    %v2067 = vunpack.c.l.b16 %v1996
    %v2068 = vunpack.c.l.b16 %v1997
    %v2069 = vunpack.c.l.b16 %v1998
    %v2070 = vunpack.c.l.b16 %v1999
    %v2071 = vunpack.c.l.b16 %v2000
    %v2072 = vpack.c.b16 %v2041, %v2040
    %v2073 = vpack.c.b16 %v2043, %v2042
    %v2074 = vpack.c.b16 %v2045, %v2044
    %v2075 = vpack.c.b16 %v2047, %v2046
    %v2076 = vpack.c.b16 %v2049, %v2048
    %v2077 = vpack.c.b16 %v2051, %v2050
    %v2078 = vpack.c.b16 %v2053, %v2052
    %v2079 = vpack.c.b16 %v2055, %v2054
    %v2080 = vpack.c.b16 %v2057, %v2056
    %v2081 = vpack.c.b16 %v2059, %v2058
    %v2082 = vpack.c.b16 %v2061, %v2060
    %v2083 = vpack.c.b16 %v2063, %v2062
    %v2084 = vpack.c.b16 %v2065, %v2064
    %v2085 = vpack.c.b16 %v2067, %v2066
    %v2086 = vpack.c.b16 %v2069, %v2068
    %v2087 = vpack.c.b16 %v2071, %v2070
    %2104 = vmatprep.subr.bf16.mxu0 0
    %2105 = vmatpush1.bf16.msra.mxu0 %v2072
    %2106 = vmatprep.subr.bf16.mxu0 0
    %2107 = vmatpush1.bf16.msra.mxu0 %v2073
    %2108 = vmatprep.subr.bf16.mxu0 0
    %2109 = vmatpush1.bf16.msra.mxu0 %v2074
    %2110 = vmatprep.subr.bf16.mxu0 0
    %2111 = vmatpush1.bf16.msra.mxu0 %v2075
    %2112 = vmatprep.subr.bf16.mxu0 0
    %2113 = vmatpush1.bf16.msra.mxu0 %v2076
    %2114 = vmatprep.subr.bf16.mxu0 0
    %2115 = vmatpush1.bf16.msra.mxu0 %v2077
    %2116 = vmatprep.subr.bf16.mxu0 0
    %2117 = vmatpush1.bf16.msra.mxu0 %v2078
    %2118 = vmatprep.subr.bf16.mxu0 0
    %2119 = vmatpush1.bf16.msra.mxu0 %v2079
    %2120 = vmatprep.subr.bf16.mxu0 0
    %2121 = vmatpush1.bf16.msra.mxu0 %v2080
    %2122 = vmatprep.subr.bf16.mxu0 0
    %2123 = vmatpush1.bf16.msra.mxu0 %v2081
    %2124 = vmatprep.subr.bf16.mxu0 0
    %2125 = vmatpush1.bf16.msra.mxu0 %v2082
    %2126 = vmatprep.subr.bf16.mxu0 0
    %2127 = vmatpush1.bf16.msra.mxu0 %v2083
    %2128 = vmatprep.subr.bf16.mxu0 0
    %2129 = vmatpush1.bf16.msra.mxu0 %v2084
    %2130 = vmatprep.subr.bf16.mxu0 0
    %2131 = vmatpush1.bf16.msra.mxu0 %v2085
    %2132 = vmatprep.subr.bf16.mxu0 0
    %2133 = vmatpush1.bf16.msra.mxu0 %v2086
    %2134 = vmatprep.subr.bf16.mxu0 0
    %2135 = vmatpush1.bf16.msra.mxu0 %v2087
    %2136 = vmatprep.mubr.bf16.mxu0 %v1968
    %2137 = vmatmul.mubr.bf16.gmra.mrb[0].mxu0 %v1967
    %v2138 = vpop.f32.mrb[0].mxu0
    %v2139 = vadd.f32 %v2006, %v2138
    %v2140 = vpop.f32.mrb[0].mxu0
    %v2141 = vpop.f32.mrb[0].mxu0
    %v2142 = vpop.f32.mrb[0].mxu0
    %2143 = vdwg.mxu0
    %v2144 = vmax.f32 %v2139, 0.0
    %v2145 = vpack.c.bf16 %v2144, %v2144
    %v2146 = vld [vmem:[%s5] sm:$0xf]
    %v2147 = vld [vmem:[%s5 + $0x4] sm:$0xf]
    %v2148 = vld [vmem:[%s5 + $0x8] sm:$0xf]
    %v2149 = vld [vmem:[%s5 + $0xc] sm:$0xf]
    %v2150 = vld [vmem:[%s5 + $0x10] sm:$0xf]
    %v2151 = vld [vmem:[%s5 + $0x14] sm:$0xf]
    %v2152 = vld [vmem:[%s5 + $0x18] sm:$0xf]
    %v2153 = vld [vmem:[%s5 + $0x1c] sm:$0xf]
    %v2154 = vld [vmem:[%s5 + $0x20] sm:$0xf]
    %v2155 = vld [vmem:[%s5 + $0x24] sm:$0xf]
    %v2156 = vld [vmem:[%s5 + $0x28] sm:$0xf]
    %v2157 = vld [vmem:[%s5 + $0x2c] sm:$0xf]
    %v2158 = vld [vmem:[%s5 + $0x30] sm:$0xf]
    %v2159 = vld [vmem:[%s5 + $0x34] sm:$0xf]
    %v2160 = vld [vmem:[%s5 + $0x38] sm:$0xf]
    %v2161 = vld [vmem:[%s5 + $0x3c] sm:$0xf]
    %v2162 = vld [vmem:[%s6] sm:$0x1]
    %v2164 = vlaneseq
    %v2165 = vshrl.u32 %v2164, 7
    %v2166 = vsub.s32 0, %v2165
    %v2167 = vrot.slane %v2162, %v2166
    %v2185 = vunpack.c.l.b16 %v2146
    %v2186 = vunpack.c.l.b16 %v2147
    %v2187 = vunpack.c.l.b16 %v2148
    %v2188 = vunpack.c.l.b16 %v2149
    %v2189 = vunpack.c.l.b16 %v2150
    %v2190 = vunpack.c.l.b16 %v2151
    %v2191 = vunpack.c.l.b16 %v2152
    %v2192 = vunpack.c.l.b16 %v2153
    %v2193 = vunpack.c.l.b16 %v2154
    %v2194 = vunpack.c.l.b16 %v2155
    %v2195 = vunpack.c.l.b16 %v2156
    %v2196 = vunpack.c.l.b16 %v2157
    %v2197 = vunpack.c.l.b16 %v2158
    %v2198 = vunpack.c.l.b16 %v2159
    %v2199 = vunpack.c.l.b16 %v2160
    %v2200 = vunpack.c.l.b16 %v2161
    %v2201 = vpack.c.b16 %v2186, %v2185
    %v2202 = vpack.c.b16 %v2188, %v2187
    %v2203 = vpack.c.b16 %v2190, %v2189
    %v2204 = vpack.c.b16 %v2192, %v2191
    %v2205 = vpack.c.b16 %v2194, %v2193
    %v2206 = vpack.c.b16 %v2196, %v2195
    %v2207 = vpack.c.b16 %v2198, %v2197
    %v2208 = vpack.c.b16 %v2200, %v2199
    %2217 = vmatprep.subr.bf16.mxu0 0
    %2218 = vmatpush1.bf16.msra.mxu0 %v2201
    %2219 = vmatprep.subr.bf16.mxu0 0
    %2220 = vmatpush1.bf16.msra.mxu0 %v2202
    %2221 = vmatprep.subr.bf16.mxu0 0
    %2222 = vmatpush1.bf16.msra.mxu0 %v2203
    %2223 = vmatprep.subr.bf16.mxu0 0
    %2224 = vmatpush1.bf16.msra.mxu0 %v2204
    %2225 = vmatprep.subr.bf16.mxu0 0
    %2226 = vmatpush1.bf16.msra.mxu0 %v2205
    %2227 = vmatprep.subr.bf16.mxu0 0
    %2228 = vmatpush1.bf16.msra.mxu0 %v2206
    %2229 = vmatprep.subr.bf16.mxu0 0
    %2230 = vmatpush1.bf16.msra.mxu0 %v2207
    %2231 = vmatprep.subr.bf16.mxu0 0
    %2232 = vmatpush1.bf16.msra.mxu0 %v2208
    %2233 = vmatprep.subr.bf16.mxu0 0
    %2234 = vmatpush1.bf16.msra.mxu0 0
    %2235 = vmatprep.subr.bf16.mxu0 0
    %2236 = vmatpush1.bf16.msra.mxu0 0
    %2237 = vmatprep.subr.bf16.mxu0 0
    %2238 = vmatpush1.bf16.msra.mxu0 0
    %2239 = vmatprep.subr.bf16.mxu0 0
    %2240 = vmatpush1.bf16.msra.mxu0 0
    %2241 = vmatprep.subr.bf16.mxu0 0
    %2242 = vmatpush1.bf16.msra.mxu0 0
    %2243 = vmatprep.subr.bf16.mxu0 0
    %2244 = vmatpush1.bf16.msra.mxu0 0
    %2245 = vmatprep.subr.bf16.mxu0 0
    %2246 = vmatpush1.bf16.msra.mxu0 0
    %2247 = vmatprep.subr.bf16.mxu0 0
    %2248 = vmatpush1.bf16.msra.mxu0 0
    %2249 = vmatprep.mubr.bf16.mxu0 0
    %2250 = vmatmul.mubr.bf16.gmra.mrb[0].mxu0 %v2145
    %v2251 = vpop.f32.mrb[0].mxu0
    %v2252 = vadd.f32 %v2167, %v2251
    %v2253 = vpop.f32.mrb[0].mxu0
    %v2254 = vpop.f32.mrb[0].mxu0
    %v2255 = vpop.f32.mrb[0].mxu0
    %2256 = vdwg.mxu0
    %v2257 = vmax.f32 %v2252, 0.0
    %v2258 = vpack.c.bf16 %v2257, %v2257
    %v2259 = vld [vmem:[%s7] sm:$0xf]
    %v2260 = vld [vmem:[%s7 + $0x4] sm:$0xf]
    %v2261 = vld [vmem:[%s7 + $0x8] sm:$0xf]
    %v2262 = vld [vmem:[%s7 + $0xc] sm:$0xf]
    %v2263 = vld [vmem:[%s7 + $0x10] sm:$0xf]
    %v2264 = vld [vmem:[%s7 + $0x14] sm:$0xf]
    %v2265 = vld [vmem:[%s7 + $0x18] sm:$0xf]
    %v2266 = vld [vmem:[%s7 + $0x1c] sm:$0xf]
    %v2267 = vld [vmem:[%s8] sm:$0x1]
    %v2269 = vlaneseq
    %v2270 = vshrl.u32 %v2269, 7
    %v2271 = vsub.s32 0, %v2270
    %v2272 = vrot.slane %v2267, %v2271
    %v2282 = vunpack.c.l.b16 %v2259
    %v2283 = vunpack.c.l.b16 %v2260
    %v2284 = vunpack.c.l.b16 %v2261
    %v2285 = vunpack.c.l.b16 %v2262
    %v2286 = vunpack.c.l.b16 %v2263
    %v2287 = vunpack.c.l.b16 %v2264
    %v2288 = vunpack.c.l.b16 %v2265
    %v2289 = vunpack.c.l.b16 %v2266
    %v2290 = vpack.c.b16 %v2283, %v2282
    %v2291 = vpack.c.b16 %v2285, %v2284
    %v2292 = vpack.c.b16 %v2287, %v2286
    %v2293 = vpack.c.b16 %v2289, %v2288
    %vm2298 = vcmask 523264
    %v2300 = vsel %vm2298, %v2258, 0
    %2302 = vmatprep.subr.bf16.mxu0 0
    %2303 = vmatpush1.bf16.msra.mxu0 %v2290
    %2304 = vmatprep.subr.bf16.mxu0 0
    %2305 = vmatpush1.bf16.msra.mxu0 %v2291
    %2306 = vmatprep.subr.bf16.mxu0 0
    %2307 = vmatpush1.bf16.msra.mxu0 %v2292
    %2308 = vmatprep.subr.bf16.mxu0 0
    %2309 = vmatpush1.bf16.msra.mxu0 %v2293
    %2310 = vmatprep.subr.bf16.mxu0 0
    %2311 = vmatpush1.bf16.msra.mxu0 0
    %2312 = vmatprep.subr.bf16.mxu0 0
    %2313 = vmatpush1.bf16.msra.mxu0 0
    %2314 = vmatprep.subr.bf16.mxu0 0
    %2315 = vmatpush1.bf16.msra.mxu0 0
    %2316 = vmatprep.subr.bf16.mxu0 0
    %2317 = vmatpush1.bf16.msra.mxu0 0
    %2318 = vmatprep.subr.bf16.mxu0 0
    %2319 = vmatpush1.bf16.msra.mxu0 0
    %2320 = vmatprep.subr.bf16.mxu0 0
    %2321 = vmatpush1.bf16.msra.mxu0 0
    %2322 = vmatprep.subr.bf16.mxu0 0
    %2323 = vmatpush1.bf16.msra.mxu0 0
    %2324 = vmatprep.subr.bf16.mxu0 0
    %2325 = vmatpush1.bf16.msra.mxu0 0
    %2326 = vmatprep.subr.bf16.mxu0 0
    %2327 = vmatpush1.bf16.msra.mxu0 0
    %2328 = vmatprep.subr.bf16.mxu0 0
    %2329 = vmatpush1.bf16.msra.mxu0 0
    %2330 = vmatprep.subr.bf16.mxu0 0
    %2331 = vmatpush1.bf16.msra.mxu0 0
    %2332 = vmatprep.subr.bf16.mxu0 0
    %2333 = vmatpush1.bf16.msra.mxu0 0
    %2334 = vmatprep.mubr.bf16.mxu0 0
    %2335 = vmatmul.mubr.bf16.gmra.mrb[0].mxu0 %v2300
    %v2336 = vpop.f32.mrb[0].mxu0
    %v2337 = vadd.f32 %v2272, %v2336
    %v2338 = vpop.f32.mrb[0].mxu0
    %v2339 = vpop.f32.mrb[0].mxu0
    %v2340 = vpop.f32.mrb[0].mxu0
    %2341 = vdwg.mxu0
    %vm2342 = vcmask 15360
    %2343 = vst.msk [vmem:[%s9] sm:$0xff] %vm2342, %v2337
    // Predicated region
    $region46: #{ann_forward.1} parent=1 // pred_check
      _
    $region47: #{ann_forward.1} parent=1 // pred_check_branch
      %2345 = sbr.rel (0) target = $region49
    $region48: #{ann_forward.1} parent=1 // pred_region
      _
    $region49: #{ann_forward.1} parent=1 // pred_fallthru
      _
    // Predicated region
    $region50: #{ann_forward.1} parent=1 // pred_check
      _
    $region51: #{ann_forward.1} parent=1 // pred_check_branch
      %2347 = sbr.rel (0) target = $region53
    $region52: #{ann_forward.1} parent=1 // pred_region
      _
    $region53: #{ann_forward.1} parent=1 // pred_fallthru
      _
    %2348 = vsyncpa [#allocation3], 1
    %2349 = vsyncpa [#allocation5], 1

</llo_original>
